<compile_context>
chip_gen: v5e
topology: v5e:2x2
jax: 0.10.0
libtpu: 0.0.40
codegen_flags: <defaults>
</compile_context>

<pallas_src>
import functools
import numpy as np
import jax
import jax.numpy as jnp
from jax import lax
from jax.experimental import pallas as pl
from jax.experimental.pallas import tpu as pltpu

# ------------------------------ problem sizes -------------------------------
B = 2
H = W = 8
C_IN = 32                       # input_dim
C_OUT = 32                      # output_dim
HEAD_DIM = 8
N_HEADS = C_IN // HEAD_DIM      # 4
WIN = 4                         # window_size
NTOK = WIN * WIN                # tokens per window            = 16
NWIN = (H // WIN) * (W // WIN)  # windows per image            = 4
T = NWIN * NTOK                 # tokens per image             = 64
BT = B * T                      # batch folded into M          = 128
NHT = N_HEADS * BT              # heads folded into N (block-diag) = 512
SCALE = HEAD_DIM ** (-0.5)
NEG = -1e30                     # "-inf" that stays finite; exp() underflows to 0


# ------------------------------ Pallas kernel --------------------------------
def wmsa_kernel(x_ref, wqkv_ref, bqkv_ref, bias_ref, wo_ref, bo_ref, o_ref,
                kbdt_ref, vbd_ref):
    """Whole (batch-folded) WMSA forward: x (BT, C_IN) -> o (BT, C_OUT).

    bias_ref (BT, N_HEADS*BT): per-head attention bias with head h occupying
    lane columns [h*BT, (h+1)*BT).  It already folds (a) the relative-position
    embedding, (b) the SW shift mask, and (c) NEG off the window/batch block
    diagonal, so a plain row softmax over each head segment equals the
    per-window softmax of the reference module.
    """
    x = x_ref[...]                                                    # (BT, C_IN)
    # QKV projection; SCALE is pre-folded into the Q columns of wqkv/bqkv.
    qkv = jnp.dot(x, wqkv_ref[...],
                  preferred_element_type=jnp.float32) + bqkv_ref[...]  # (BT, 3C)
    q = qkv[:, :C_IN]                                                  # scaled q
    k = qkv[:, C_IN:2 * C_IN]
    v = qkv[:, 2 * C_IN:]

    # Build block-diagonal K^T (C_IN, NHT) and V (NHT, C_IN) so ALL heads run
    # as two MXU-native matmuls instead of 2*N_HEADS tiny (.,8)x(8,.) ones.
    kt = k.T                                   # one shared (BT,C)->(C,BT) transpose
    kbdt_ref[...] = jnp.zeros_like(kbdt_ref)
    vbd_ref[...] = jnp.zeros_like(vbd_ref)
    for h in range(N_HEADS):                   # trace-time loop: static slice stores
        r0, c0 = h * HEAD_DIM, h * BT
        kbdt_ref[r0:r0 + HEAD_DIM, c0:c0 + BT] = kt[r0:r0 + HEAD_DIM, :]
        vbd_ref[c0:c0 + BT, r0:r0 + HEAD_DIM] = v[:, r0:r0 + HEAD_DIM]

    # (BT, C_IN) @ (C_IN, NHT): all-head similarities, lane-dense rows.
    sim = jnp.dot(q, kbdt_ref[...],
                  preferred_element_type=jnp.float32) + bias_ref[...]  # (BT, NHT)

    # Segmented softmax: one lane-aligned (BT, BT) slice per head.
    probs = []
    for h in range(N_HEADS):
        s = sim[:, h * BT:(h + 1) * BT]
        m = jnp.max(s, axis=-1, keepdims=True)
        e = jnp.exp(s - m)
        probs.append(e * pl.reciprocal(jnp.sum(e, axis=-1, keepdims=True),
                                       approx=True))
    p = jnp.concatenate(probs, axis=-1)                                # (BT, NHT)

    # (BT, NHT) @ (NHT, C_IN): Vbd's column placement gives the (h c) concat
    # for free; then the output projection.
    attn = jnp.dot(p, vbd_ref[...], preferred_element_type=jnp.float32)
    o_ref[...] = jnp.dot(attn, wo_ref[...],
                         preferred_element_type=jnp.float32) + bo_ref[...]


# ------------------------------ bias building --------------------------------
_idx = np.arange(WIN)
_coords = np.stack(np.meshgrid(_idx, _idx, indexing="ij"), -1).reshape(-1, 2)
_REL = _coords[:, None, :] - _coords[None, :, :] + (WIN - 1)   # (NTOK, NTOK, 2)


def relative_embedding(rp):
    """rp: (n_heads, 2p-1, 2p-1) -> (n_heads, NTOK, NTOK) (matches the module)."""
    return rp[:, _REL[..., 0], _REL[..., 1]]


def generate_mask(hw, ww, p, shift):
    """SW-MSA shift mask, numpy bool (nw, NTOK, NTOK) — True = masked."""
    m = np.zeros((hw, ww, p, p, p, p), dtype=bool)
    s = p - shift
    m[-1, :, :s, :, s:, :] = True
    m[-1, :, s:, :, :s, :] = True
    m[:, -1, :, :s, :, s:] = True
    m[:, -1, :, s:, :, :s] = True
    return m.reshape(hw * ww, p * p, p * p)


def _build_valid_mask(attn_type):
    """Numpy bool (BT, BT): True where attention is allowed (same batch element,
    same window, not SW-shift-masked)."""
    gwin = np.arange(BT) // NTOK                       # global window id (incl. batch)
    valid = gwin[:, None] == gwin[None, :]
    if attn_type != "W":
        m = generate_mask(H // WIN, W // WIN, WIN, WIN // 2)   # (NWIN, NTOK, NTOK)
        wr = gwin % NWIN
        pr = np.arange(BT) % NTOK
        shift_masked = m[wr[:, None], pr[:, None], pr[None, :]]
        valid = valid & ~shift_masked
    return valid


def build_attention_bias(rp, attn_type):
    """(BT, N_HEADS*BT) additive bias for the block-diagonal sim layout.
    Depends only on rp / attn_type -> build once per weight update."""
    rel = relative_embedding(rp)                                   # (NH, NTOK, NTOK)
    tiled = jnp.tile(rel, (1, BT // NTOK, BT // NTOK))             # (NH, BT, BT)
    valid = jnp.asarray(_build_valid_mask(attn_type))              # (BT, BT) const
    bias = jnp.where(valid[None], tiled, NEG)                      # single fused where
    return bias.transpose(1, 0, 2).reshape(BT, NHT)                # head h -> cols h*BT..


def prepare_wmsa_params(wqkv, bqkv, rp, attn_type):
    """Hoisted prep (once per weight update): fold SCALE into the Q projection
    and build the dense attention bias."""
    scale_vec = jnp.concatenate([jnp.full((C_IN,), SCALE, jnp.float32),
                                 jnp.ones((2 * C_IN,), jnp.float32)])
    wqkv_s = wqkv * scale_vec[None, :]
    bqkv_s = (bqkv * scale_vec).reshape(1, 3 * C_IN)
    bias_bd = build_attention_bias(rp, attn_type)
    return wqkv_s, bqkv_s, bias_bd


# ------------------------------ wrapper ---------------------------------------
@functools.partial(jax.jit, static_argnames=("attn_type",))
def wmsa_forward(x, wqkv_s, bqkv_s, bias_bd, wo, bo, attn_type):
    """x: (B, H, W, C_IN) float32 -> (B, H, W, C_OUT) float32."""
    b, h, w, c = x.shape
    p = WIN
    shift = p // 2
    hw, ww = h // p, w // p

    if attn_type != "W":
        x = jnp.roll(x, shift=(-shift, -shift), axis=(1, 2))

    # b (w1 p1) (w2 p2) c -> (b (w1 w2) (p1 p2)) c   (batch folded into M)
    xf = (x.reshape(b, hw, p, ww, p, c)
           .transpose(0, 1, 3, 2, 4, 5)
           .reshape(BT, c))

    # Single kernel invocation (no grid): total resident data << VMEM on all
    # generations, so whole-array blocks; all matrix math lives in the kernel.
    # TODO(synk): on v7x one could instead keep grid=(B,) with CORE_PARALLEL to
    # split the two batch elements across TensorCores.
    out = pl.pallas_call(
        wmsa_kernel,
        out_shape=jax.ShapeDtypeStruct((BT, C_OUT), jnp.float32),
        scratch_shapes=[pltpu.VMEM((C_IN, NHT), jnp.float32),   # block-diag K^T
                        pltpu.VMEM((NHT, C_IN), jnp.float32)],  # block-diag V
    )(xf, wqkv_s, bqkv_s, bias_bd, wo, bo.reshape(1, C_OUT))

    # (b (w1 w2) (p1 p2)) c -> b (w1 p1) (w2 p2) c
    out = (out.reshape(b, hw, ww, p, p, C_OUT)
              .transpose(0, 1, 3, 2, 4, 5)
              .reshape(b, h, w, C_OUT))
    if attn_type != "W":
        out = jnp.roll(out, shift=(shift, shift), axis=(1, 2))
    return out


# ------------------------- plain-JAX reference (checking) ---------------------
def reference_forward(x, wqkv, bqkv, rp, wo, bo, attn_type):
    b, h, w, c = x.shape
    p = WIN
    shift = p // 2
    nh = N_HEADS
    hd = HEAD_DIM
    hw, ww = h // p, w // p

    if attn_type != "W":
        x = jnp.roll(x, shift=(-shift, -shift), axis=(1, 2))
    xw = (x.reshape(b, hw, p, ww, p, c)
           .transpose(0, 1, 3, 2, 4, 5)
           .reshape(b, hw * ww, p * p, c))
    qkv = xw @ wqkv + bqkv                                            # (b, nw, np, 3c)
    qkv = qkv.reshape(b, hw * ww, p * p, 3 * nh, hd)
    q = jnp.moveaxis(qkv[..., :nh, :], 3, 0)                          # (nh, b, nw, np, hd)
    k = jnp.moveaxis(qkv[..., nh:2 * nh, :], 3, 0)
    v = jnp.moveaxis(qkv[..., 2 * nh:, :], 3, 0)
    sim = jnp.einsum("hbwpc,hbwqc->hbwpq", q, k) * SCALE
    sim = sim + relative_embedding(rp)[:, None, None]
    if attn_type != "W":
        mask = jnp.asarray(generate_mask(hw, ww, p, shift))
        sim = jnp.where(mask[None, None], -jnp.inf, sim)
    probs = jax.nn.softmax(sim, axis=-1)
    out = jnp.einsum("hbwpq,hbwqc->hbwpc", probs, v)
    out = jnp.moveaxis(out, 0, 3).reshape(b, hw * ww, p * p, c)       # (h c) order
    out = out @ wo + bo
    out = (out.reshape(b, hw, ww, p, p, C_OUT)
              .transpose(0, 1, 3, 2, 4, 5)
              .reshape(b, h, w, C_OUT))
    if attn_type != "W":
        out = jnp.roll(out, shift=(shift, shift), axis=(1, 2))
    return out


# ------------------------------------ main ------------------------------------
if __name__ == "__main__":
    key = jax.random.PRNGKey(0)
    ks = jax.random.split(key, 6)
    x = jax.random.normal(ks[0], (B, H, W, C_IN), jnp.float32)
    wqkv = jax.random.normal(ks[1], (C_IN, 3 * C_IN), jnp.float32) * 0.10
    bqkv = jax.random.normal(ks[2], (3 * C_IN,), jnp.float32) * 0.10
    # relative_position_params, stored (n_heads, 2p-1, 2p-1) like the module
    # after its view/transpose.  trunc_normal(std=0.02) approximated by normal.
    rp = jax.random.normal(ks[3], (N_HEADS, 2 * WIN - 1, 2 * WIN - 1),
                           jnp.float32) * 0.02
    wo = jax.random.normal(ks[4], (C_IN, C_OUT), jnp.float32) * 0.10
    bo = jax.random.normal(ks[5], (C_OUT,), jnp.float32) * 0.10

    ok = True
    for attn_type in ("W", "SW"):
        # Hoisted: bias + scale-folded weights built once per weight update.
        wqkv_s, bqkv_s, bias_bd = prepare_wmsa_params(wqkv, bqkv, rp, attn_type)
        out = jax.block_until_ready(
            wmsa_forward(x, wqkv_s, bqkv_s, bias_bd, wo, bo, attn_type))
        ref = jax.block_until_ready(
            reference_forward(x, wqkv, bqkv, rp, wo, bo, attn_type))
        assert out.shape == (B, H, W, C_OUT)
        err = float(jnp.max(jnp.abs(out - ref)))
        # Slightly relaxed tolerance: approx reciprocal in the softmax denom.
        if not np.allclose(np.asarray(out), np.asarray(ref), atol=5e-3, rtol=5e-3):
            ok = False
            print(f"type={attn_type} max_abs_err={err}")
    assert ok
    print("KERNEL_OK")
</pallas_src>

<mosaic_0001>
module attributes {stable_mosaic.version = 11 : i64} {
  func.func @wmsa_kernel(%arg0: memref<128x32xf32, #tpu.memory_space<vmem>>, %arg1: memref<32x96xf32, #tpu.memory_space<vmem>>, %arg2: memref<1x96xf32, #tpu.memory_space<vmem>>, %arg3: memref<128x512xf32, #tpu.memory_space<vmem>>, %arg4: memref<32x32xf32, #tpu.memory_space<vmem>>, %arg5: memref<1x32xf32, #tpu.memory_space<vmem>>, %arg6: memref<128x32xf32, #tpu.memory_space<vmem>>, %arg7: memref<32x512xf32, #tpu.memory_space<vmem>>, %arg8: memref<512x32xf32, #tpu.memory_space<vmem>>) attributes {dimension_semantics = [], scalar_prefetch = 0 : i64, scratch_operands = 2 : i64, tpu.core_type = #tpu.core_type<tc>} {
    %c0 = arith.constant 0 : index
    %c0_0 = arith.constant 0 : index
    %0 = vector.load %arg0[%c0, %c0_0] : memref<128x32xf32, #tpu.memory_space<vmem>>, vector<128x32xf32>
    %c0_1 = arith.constant 0 : index
    %c0_2 = arith.constant 0 : index
    %1 = vector.load %arg1[%c0_1, %c0_2] : memref<32x96xf32, #tpu.memory_space<vmem>>, vector<32x96xf32>
    %cst = arith.constant dense<0.000000e+00> : vector<128x96xf32>
    %2 = tpu.matmul %0, %1, %cst {dimension_numbers = #tpu.dot_dimension_numbers<[1], [0], [0], [1], [0, 0, 1, 1], [], []>} : vector<128x32xf32>, vector<32x96xf32>, vector<128x96xf32> -> vector<128x96xf32>
    %c0_3 = arith.constant 0 : index
    %c0_4 = arith.constant 0 : index
    %3 = vector.load %arg2[%c0_3, %c0_4] : memref<1x96xf32, #tpu.memory_space<vmem>>, vector<1x96xf32>
    %4 = vector.broadcast %3 : vector<1x96xf32> to vector<128x96xf32>
    %5 = arith.addf %2, %4 : vector<128x96xf32>
    %6 = vector.extract_strided_slice %5 {offsets = [0, 0], sizes = [128, 32], strides = [1, 1]} : vector<128x96xf32> to vector<128x32xf32>
    %7 = vector.extract_strided_slice %5 {offsets = [0, 32], sizes = [128, 32], strides = [1, 1]} : vector<128x96xf32> to vector<128x32xf32>
    %8 = vector.extract_strided_slice %5 {offsets = [0, 64], sizes = [128, 32], strides = [1, 1]} : vector<128x96xf32> to vector<128x32xf32>
    %9 = tpu.transpose %7, [1, 0] : vector<128x32xf32> -> vector<32x128xf32>
    %cst_5 = arith.constant 0.000000e+00 : f32
    %10 = vector.broadcast %cst_5 : f32 to vector<32x512xf32>
    %c0_6 = arith.constant 0 : index
    %c0_7 = arith.constant 0 : index
    %11 = vector.load %arg7[%c0_6, %c0_7] : memref<32x512xf32, #tpu.memory_space<vmem>>, vector<32x512xf32>
    tpu.vector_store %arg7[%c0_6, %c0_7], %10 {strides = array<i32>} : memref<32x512xf32, #tpu.memory_space<vmem>>, vector<32x512xf32>,
    %cst_8 = arith.constant 0.000000e+00 : f32
    %12 = vector.broadcast %cst_8 : f32 to vector<512x32xf32>
    %c0_9 = arith.constant 0 : index
    %c0_10 = arith.constant 0 : index
    %13 = vector.load %arg8[%c0_9, %c0_10] : memref<512x32xf32, #tpu.memory_space<vmem>>, vector<512x32xf32>
    tpu.vector_store %arg8[%c0_9, %c0_10], %12 {strides = array<i32>} : memref<512x32xf32, #tpu.memory_space<vmem>>, vector<512x32xf32>,
    %14 = vector.extract_strided_slice %9 {offsets = [0, 0], sizes = [8, 128], strides = [1, 1]} : vector<32x128xf32> to vector<8x128xf32>
    %c0_11 = arith.constant 0 : index
    %c0_12 = arith.constant 0 : index
    %15 = vector.load %arg7[%c0_11, %c0_12] : memref<32x512xf32, #tpu.memory_space<vmem>>, vector<8x128xf32>
    tpu.vector_store %arg7[%c0_11, %c0_12], %14 {strides = array<i32>} : memref<32x512xf32, #tpu.memory_space<vmem>>, vector<8x128xf32>,
    %16 = vector.extract_strided_slice %8 {offsets = [0, 0], sizes = [128, 8], strides = [1, 1]} : vector<128x32xf32> to vector<128x8xf32>
    %c0_13 = arith.constant 0 : index
    %c0_14 = arith.constant 0 : index
    %17 = vector.load %arg8[%c0_13, %c0_14] : memref<512x32xf32, #tpu.memory_space<vmem>>, vector<128x8xf32>
    tpu.vector_store %arg8[%c0_13, %c0_14], %16 {strides = array<i32>} : memref<512x32xf32, #tpu.memory_space<vmem>>, vector<128x8xf32>,
    %18 = vector.extract_strided_slice %9 {offsets = [8, 0], sizes = [8, 128], strides = [1, 1]} : vector<32x128xf32> to vector<8x128xf32>
    %c8 = arith.constant 8 : index
    %c128 = arith.constant 128 : index
    %19 = vector.load %arg7[%c8, %c128] : memref<32x512xf32, #tpu.memory_space<vmem>>, vector<8x128xf32>
    tpu.vector_store %arg7[%c8, %c128], %18 {strides = array<i32>} : memref<32x512xf32, #tpu.memory_space<vmem>>, vector<8x128xf32>,
    %20 = vector.extract_strided_slice %8 {offsets = [0, 8], sizes = [128, 8], strides = [1, 1]} : vector<128x32xf32> to vector<128x8xf32>
    %c128_15 = arith.constant 128 : index
    %c8_16 = arith.constant 8 : index
    %21 = vector.load %arg8[%c128_15, %c8_16] : memref<512x32xf32, #tpu.memory_space<vmem>>, vector<128x8xf32>
    tpu.vector_store %arg8[%c128_15, %c8_16], %20 {strides = array<i32>} : memref<512x32xf32, #tpu.memory_space<vmem>>, vector<128x8xf32>,
    %22 = vector.extract_strided_slice %9 {offsets = [16, 0], sizes = [8, 128], strides = [1, 1]} : vector<32x128xf32> to vector<8x128xf32>
    %c16 = arith.constant 16 : index
    %c256 = arith.constant 256 : index
    %23 = vector.load %arg7[%c16, %c256] : memref<32x512xf32, #tpu.memory_space<vmem>>, vector<8x128xf32>
    tpu.vector_store %arg7[%c16, %c256], %22 {strides = array<i32>} : memref<32x512xf32, #tpu.memory_space<vmem>>, vector<8x128xf32>,
    %24 = vector.extract_strided_slice %8 {offsets = [0, 16], sizes = [128, 8], strides = [1, 1]} : vector<128x32xf32> to vector<128x8xf32>
    %c256_17 = arith.constant 256 : index
    %c16_18 = arith.constant 16 : index
    %25 = vector.load %arg8[%c256_17, %c16_18] : memref<512x32xf32, #tpu.memory_space<vmem>>, vector<128x8xf32>
    tpu.vector_store %arg8[%c256_17, %c16_18], %24 {strides = array<i32>} : memref<512x32xf32, #tpu.memory_space<vmem>>, vector<128x8xf32>,
    %26 = vector.extract_strided_slice %9 {offsets = [24, 0], sizes = [8, 128], strides = [1, 1]} : vector<32x128xf32> to vector<8x128xf32>
    %c24 = arith.constant 24 : index
    %c384 = arith.constant 384 : index
    %27 = vector.load %arg7[%c24, %c384] : memref<32x512xf32, #tpu.memory_space<vmem>>, vector<8x128xf32>
    tpu.vector_store %arg7[%c24, %c384], %26 {strides = array<i32>} : memref<32x512xf32, #tpu.memory_space<vmem>>, vector<8x128xf32>,
    %28 = vector.extract_strided_slice %8 {offsets = [0, 24], sizes = [128, 8], strides = [1, 1]} : vector<128x32xf32> to vector<128x8xf32>
    %c384_19 = arith.constant 384 : index
    %c24_20 = arith.constant 24 : index
    %29 = vector.load %arg8[%c384_19, %c24_20] : memref<512x32xf32, #tpu.memory_space<vmem>>, vector<128x8xf32>
    tpu.vector_store %arg8[%c384_19, %c24_20], %28 {strides = array<i32>} : memref<512x32xf32, #tpu.memory_space<vmem>>, vector<128x8xf32>,
    %c0_21 = arith.constant 0 : index
    %c0_22 = arith.constant 0 : index
    %30 = vector.load %arg7[%c0_21, %c0_22] : memref<32x512xf32, #tpu.memory_space<vmem>>, vector<32x512xf32>
    %cst_23 = arith.constant dense<0.000000e+00> : vector<128x512xf32>
    %31 = tpu.matmul %6, %30, %cst_23 {dimension_numbers = #tpu.dot_dimension_numbers<[1], [0], [0], [1], [0, 0, 1, 1], [], []>} : vector<128x32xf32>, vector<32x512xf32>, vector<128x512xf32> -> vector<128x512xf32>
    %c0_24 = arith.constant 0 : index
    %c0_25 = arith.constant 0 : index
    %32 = vector.load %arg3[%c0_24, %c0_25] : memref<128x512xf32, #tpu.memory_space<vmem>>, vector<128x512xf32>
    %33 = arith.addf %31, %32 : vector<128x512xf32>
    %34 = vector.extract_strided_slice %33 {offsets = [0, 0], sizes = [128, 128], strides = [1, 1]} : vector<128x512xf32> to vector<128x128xf32>
    %cst_26 = arith.constant dense<0xFF800000> : vector<128xf32>
    %35 = vector.multi_reduction <maximumf>, %34, %cst_26 [1] : vector<128x128xf32> to vector<128xf32>
    %36 = vector.shape_cast %35 : vector<128xf32> to vector<128x1xf32>
    %37 = vector.broadcast %36 : vector<128x1xf32> to vector<128x128xf32>
    %38 = arith.subf %34, %37 : vector<128x128xf32>
    %39 = math.exp %38 : vector<128x128xf32>
    %cst_27 = arith.constant dense<0.000000e+00> : vector<128xf32>
    %40 = vector.multi_reduction <add>, %39, %cst_27 [1] : vector<128x128xf32> to vector<128xf32>
    %41 = vector.shape_cast %40 : vector<128xf32> to vector<128x1xf32>
    %42 = tpu.reciprocal %41 {approx = true} : vector<128x1xf32> -> vector<128x1xf32>
    %43 = vector.broadcast %42 : vector<128x1xf32> to vector<128x128xf32>
    %44 = arith.mulf %39, %43 : vector<128x128xf32>
    %45 = vector.extract_strided_slice %33 {offsets = [0, 128], sizes = [128, 128], strides = [1, 1]} : vector<128x512xf32> to vector<128x128xf32>
    %cst_28 = arith.constant dense<0xFF800000> : vector<128xf32>
    %46 = vector.multi_reduction <maximumf>, %45, %cst_28 [1] : vector<128x128xf32> to vector<128xf32>
    %47 = vector.shape_cast %46 : vector<128xf32> to vector<128x1xf32>
    %48 = vector.broadcast %47 : vector<128x1xf32> to vector<128x128xf32>
    %49 = arith.subf %45, %48 : vector<128x128xf32>
    %50 = math.exp %49 : vector<128x128xf32>
    %cst_29 = arith.constant dense<0.000000e+00> : vector<128xf32>
    %51 = vector.multi_reduction <add>, %50, %cst_29 [1] : vector<128x128xf32> to vector<128xf32>
    %52 = vector.shape_cast %51 : vector<128xf32> to vector<128x1xf32>
    %53 = tpu.reciprocal %52 {approx = true} : vector<128x1xf32> -> vector<128x1xf32>
    %54 = vector.broadcast %53 : vector<128x1xf32> to vector<128x128xf32>
    %55 = arith.mulf %50, %54 : vector<128x128xf32>
    %56 = vector.extract_strided_slice %33 {offsets = [0, 256], sizes = [128, 128], strides = [1, 1]} : vector<128x512xf32> to vector<128x128xf32>
    %cst_30 = arith.constant dense<0xFF800000> : vector<128xf32>
    %57 = vector.multi_reduction <maximumf>, %56, %cst_30 [1] : vector<128x128xf32> to vector<128xf32>
    %58 = vector.shape_cast %57 : vector<128xf32> to vector<128x1xf32>
    %59 = vector.broadcast %58 : vector<128x1xf32> to vector<128x128xf32>
    %60 = arith.subf %56, %59 : vector<128x128xf32>
    %61 = math.exp %60 : vector<128x128xf32>
    %cst_31 = arith.constant dense<0.000000e+00> : vector<128xf32>
    %62 = vector.multi_reduction <add>, %61, %cst_31 [1] : vector<128x128xf32> to vector<128xf32>
    %63 = vector.shape_cast %62 : vector<128xf32> to vector<128x1xf32>
    %64 = tpu.reciprocal %63 {approx = true} : vector<128x1xf32> -> vector<128x1xf32>
    %65 = vector.broadcast %64 : vector<128x1xf32> to vector<128x128xf32>
    %66 = arith.mulf %61, %65 : vector<128x128xf32>
    %67 = vector.extract_strided_slice %33 {offsets = [0, 384], sizes = [128, 128], strides = [1, 1]} : vector<128x512xf32> to vector<128x128xf32>
    %cst_32 = arith.constant dense<0xFF800000> : vector<128xf32>
    %68 = vector.multi_reduction <maximumf>, %67, %cst_32 [1] : vector<128x128xf32> to vector<128xf32>
    %69 = vector.shape_cast %68 : vector<128xf32> to vector<128x1xf32>
    %70 = vector.broadcast %69 : vector<128x1xf32> to vector<128x128xf32>
    %71 = arith.subf %67, %70 : vector<128x128xf32>
    %72 = math.exp %71 : vector<128x128xf32>
    %cst_33 = arith.constant dense<0.000000e+00> : vector<128xf32>
    %73 = vector.multi_reduction <add>, %72, %cst_33 [1] : vector<128x128xf32> to vector<128xf32>
    %74 = vector.shape_cast %73 : vector<128xf32> to vector<128x1xf32>
    %75 = tpu.reciprocal %74 {approx = true} : vector<128x1xf32> -> vector<128x1xf32>
    %76 = vector.broadcast %75 : vector<128x1xf32> to vector<128x128xf32>
    %77 = arith.mulf %72, %76 : vector<128x128xf32>
    %78 = tpu.concatenate %44, %55, %66, %77 in 1 : vector<128x128xf32>, vector<128x128xf32>, vector<128x128xf32>, vector<128x128xf32> -> vector<128x512xf32>
    %c0_34 = arith.constant 0 : index
    %c0_35 = arith.constant 0 : index
    %79 = vector.load %arg8[%c0_34, %c0_35] : memref<512x32xf32, #tpu.memory_space<vmem>>, vector<512x32xf32>
    %cst_36 = arith.constant dense<0.000000e+00> : vector<128x32xf32>
    %80 = tpu.matmul %78, %79, %cst_36 {dimension_numbers = #tpu.dot_dimension_numbers<[1], [0], [0], [1], [0, 0, 1, 1], [], []>} : vector<128x512xf32>, vector<512x32xf32>, vector<128x32xf32> -> vector<128x32xf32>
    %c0_37 = arith.constant 0 : index
    %c0_38 = arith.constant 0 : index
    %81 = vector.load %arg4[%c0_37, %c0_38] : memref<32x32xf32, #tpu.memory_space<vmem>>, vector<32x32xf32>
    %cst_39 = arith.constant dense<0.000000e+00> : vector<128x32xf32>
    %82 = tpu.matmul %80, %81, %cst_39 {dimension_numbers = #tpu.dot_dimension_numbers<[1], [0], [0], [1], [0, 0, 1, 1], [], []>} : vector<128x32xf32>, vector<32x32xf32>, vector<128x32xf32> -> vector<128x32xf32>
    %c0_40 = arith.constant 0 : index
    %c0_41 = arith.constant 0 : index
    %83 = vector.load %arg5[%c0_40, %c0_41] : memref<1x32xf32, #tpu.memory_space<vmem>>, vector<1x32xf32>
    %84 = vector.broadcast %83 : vector<1x32xf32> to vector<128x32xf32>
    %85 = arith.addf %82, %84 : vector<128x32xf32>
    %c0_42 = arith.constant 0 : index
    %c0_43 = arith.constant 0 : index
    %86 = vector.load %arg6[%c0_42, %c0_43] : memref<128x32xf32, #tpu.memory_space<vmem>>, vector<128x32xf32>
    tpu.vector_store %arg6[%c0_42, %c0_43], %85 {strides = array<i32>} : memref<128x32xf32, #tpu.memory_space<vmem>>, vector<128x32xf32>,
    return
  }
}

</mosaic_0001>

<llo_original>
// kernel: wmsa_forward.1
$region0: #{wmsa_forward.1}
  #allocation0 [shape = 'u32[]', space=smem, size = 0x4, offset = 0x4, fixed_abs, tag = 'smem constant byte address 0x4 - core index']
  #allocation1 [shape = 'u32[72,128]{1,0:T(1,128)}', space=vmem, size = 0x9000, scoped, tag = 'internal scratch']
  #allocation2 [shape = 'f32[32,512]{1,0:T(8,128)}', space=vmem, size = 0x10000, scoped, tag = 'scratch operand']
  #allocation3 [shape = 'f32[512,32]{1,0:T(8,128)}', space=vmem, size = 0x40000, scoped, tag = 'scratch operand']
  %s0 = inlined_call_operand.vmem [shape: f32[128,32], index: 0, kind: input, shape index: {}]
  %s1 = inlined_call_operand.vmem [shape: f32[32,96], index: 1, kind: input, shape index: {}]
  %s2 = inlined_call_operand.vmem [shape: f32[1,96], index: 2, kind: input, shape index: {}]
  %s3 = inlined_call_operand.hbm [shape: f32[128,512], index: 3, kind: input, shape index: {}]
  %s4 = inlined_call_operand.vmem [shape: f32[32,32], index: 4, kind: input, shape index: {}]
  %s5 = inlined_call_operand.vmem [shape: f32[1,32], index: 5, kind: input, shape index: {}]
  %s6 = inlined_call_operand.vmem [shape: f32[128,32], index: 6, kind: output, shape index: {}]
  %s7 = sld [smem:[#allocation0]]
  $region38: #{wmsa_forward.1} parent=0
    _
  %s9 = ssub.s32 1, %s7
  %s10 = scalar_select 0, %s9, %s7
  $region1: #{wmsa_forward.1} parent=0
    #allocation4 [shape = 'u8[262144]{0}', space=vmem, size = 0x40000, scoped, tag = 'input window, operand 3, single buffered']
    #allocation5 [shape = 's32[1]{0}', space=sflag, size = 0x4, scoped, tag = 'scoped memory for wmsa_forward.1']
    %11 = vsyncpa [#allocation5], 0
    // Predicated region
    $region2: #{wmsa_forward.1} parent=1 // pred_check
      _
    $region3: #{wmsa_forward.1} parent=1 // pred_check_branch
      %13 = sbr.rel (0) target = $region5
    $region4: #{wmsa_forward.1} parent=1 // pred_region
      _
    $region5: #{wmsa_forward.1} parent=1 // pred_fallthru
      _
    // Predicated region
    $region6: #{wmsa_forward.1} parent=1 // pred_check
      _
    $region7: #{wmsa_forward.1} parent=1 // pred_check_branch
      %15 = sbr.rel (0) target = $region9
    $region8: #{wmsa_forward.1} parent=1 // pred_region
      _
    $region9: #{wmsa_forward.1} parent=1 // pred_fallthru
      _
    // Predicated region
    $region10: #{wmsa_forward.1} parent=1 // pred_check
      _
    $region11: #{wmsa_forward.1} parent=1 // pred_check_branch
      %17 = sbr.rel (0) target = $region13
    $region12: #{wmsa_forward.1} parent=1 // pred_region
      _
    $region13: #{wmsa_forward.1} parent=1 // pred_fallthru
      _
    // Predicated region
    $region14: #{wmsa_forward.1} parent=1 // pred_check
      _
    $region15: #{wmsa_forward.1} parent=1 // pred_check_branch
      %19 = sbr.rel (0) target = $region17
    $region16: #{wmsa_forward.1} parent=1 // pred_region
      %21 = vsyncadd [#allocation5], 0
      %s22 = sshll.u32 %s3, 4
      %s23 = int_to_ptr.hbm [resolvable:$true] %s22
      %s24 = sshll.u32 [#allocation4], 4
      %s25 = int_to_ptr.vmem [resolvable:$true] %s24
      %30 = dma.hbm_to_vmem [thread:$0]  %s23, 8192, %s25, [#allocation5], 512, 512, 32
    $region17: #{wmsa_forward.1} parent=1 // pred_fallthru
      _
    // Predicated region
    $region18: #{wmsa_forward.1} parent=1 // pred_check
      _
    $region19: #{wmsa_forward.1} parent=1 // pred_check_branch
      %32 = sbr.rel (0) target = $region21
    $region20: #{wmsa_forward.1} parent=1 // pred_region
      _
    $region21: #{wmsa_forward.1} parent=1 // pred_fallthru
      _
    // Predicated region
    $region22: #{wmsa_forward.1} parent=1 // pred_check
      _
    $region23: #{wmsa_forward.1} parent=1 // pred_check_branch
      %34 = sbr.rel (0) target = $region25
    $region24: #{wmsa_forward.1} parent=1 // pred_region
      _
    $region25: #{wmsa_forward.1} parent=1 // pred_fallthru
      _
    // Predicated region
    $region26: #{wmsa_forward.1} parent=1 // pred_check
      _
    $region27: #{wmsa_forward.1} parent=1 // pred_check_branch
      %36 = sbr.rel (0) target = $region29
    $region28: #{wmsa_forward.1} parent=1 // pred_region
      %38 = dma.done [#allocation5], 8192
    $region29: #{wmsa_forward.1} parent=1 // pred_fallthru
      _
    %v39 = vld [vmem:[%s0] sm:$0xff]
    %v40 = vld [vmem:[%s0 + $0x8] sm:$0xff]
    %v41 = vld [vmem:[%s0 + $0x10] sm:$0xff]
    %v42 = vld [vmem:[%s0 + $0x18] sm:$0xff]
    %v43 = vld [vmem:[%s0 + $0x20] sm:$0xff]
    %v44 = vld [vmem:[%s0 + $0x28] sm:$0xff]
    %v45 = vld [vmem:[%s0 + $0x30] sm:$0xff]
    %v46 = vld [vmem:[%s0 + $0x38] sm:$0xff]
    %v47 = vld [vmem:[%s0 + $0x40] sm:$0xff]
    %v48 = vld [vmem:[%s0 + $0x48] sm:$0xff]
    %v49 = vld [vmem:[%s0 + $0x50] sm:$0xff]
    %v50 = vld [vmem:[%s0 + $0x58] sm:$0xff]
    %v51 = vld [vmem:[%s0 + $0x60] sm:$0xff]
    %v52 = vld [vmem:[%s0 + $0x68] sm:$0xff]
    %v53 = vld [vmem:[%s0 + $0x70] sm:$0xff]
    %v54 = vld [vmem:[%s0 + $0x78] sm:$0xff]
    %v55 = vld [vmem:[%s1] sm:$0xff]
    %v56 = vld [vmem:[%s1 + $0x8] sm:$0xff]
    %v57 = vld [vmem:[%s1 + $0x10] sm:$0xff]
    %v58 = vld [vmem:[%s1 + $0x18] sm:$0xff]
    %v59 = vld [vmem:[%s2] sm:$0x1]
    %v61 = vperm.slane %v59, 0
    %vm63 = vcmask 261120
    %v65 = vsel %vm63, %v39, 0
    %v68 = vsel %vm63, %v40, 0
    %v71 = vsel %vm63, %v41, 0
    %v74 = vsel %vm63, %v42, 0
    %v77 = vsel %vm63, %v43, 0
    %v80 = vsel %vm63, %v44, 0
    %v83 = vsel %vm63, %v45, 0
    %v86 = vsel %vm63, %v46, 0
    %v89 = vsel %vm63, %v47, 0
    %v92 = vsel %vm63, %v48, 0
    %v95 = vsel %vm63, %v49, 0
    %v98 = vsel %vm63, %v50, 0
    %v101 = vsel %vm63, %v51, 0
    %v104 = vsel %vm63, %v52, 0
    %v107 = vsel %vm63, %v53, 0
    %v110 = vsel %vm63, %v54, 0
    %112 = vmatpush.msra.mxu0 0.0
    %113 = vmatpush.msra.mxu0 0.0
    %114 = vmatpush.msra.mxu0 0.0
    %115 = vmatpush.msra.mxu0 0.0
    %116 = vmatpush.msra.mxu0 0.0
    %117 = vmatpush.msra.mxu0 0.0
    %118 = vmatpush.msra.mxu0 0.0
    %119 = vmatpush.msra.mxu0 0.0
    %120 = vmatpush.msra.mxu0 0.0
    %121 = vmatpush.msra.mxu0 0.0
    %122 = vmatpush.msra.mxu0 0.0
    %123 = vmatpush.msra.mxu0 0.0
    %124 = vmatpush.msra.mxu0 %v58
    %125 = vmatpush.msra.mxu0 %v57
    %126 = vmatpush.msra.mxu0 %v56
    %127 = vmatpush.msra.mxu0 %v55
    %128 = vmatmul.f32.gmra.mxu0 %v65
    %v129 = vpop.f32.mrf.mxu0
    %v130 = vadd.f32 %v61, %v129
    %131 = vmatmul.f32.gmra.mxu0 %v68
    %v132 = vpop.f32.mrf.mxu0
    %v133 = vadd.f32 %v61, %v132
    %134 = vmatmul.f32.gmra.mxu0 %v71
    %v135 = vpop.f32.mrf.mxu0
    %v136 = vadd.f32 %v61, %v135
    %137 = vmatmul.f32.gmra.mxu0 %v74
    %v138 = vpop.f32.mrf.mxu0
    %v139 = vadd.f32 %v61, %v138
    %140 = vmatmul.f32.gmra.mxu0 %v77
    %v141 = vpop.f32.mrf.mxu0
    %v142 = vadd.f32 %v61, %v141
    %143 = vmatmul.f32.gmra.mxu0 %v80
    %v144 = vpop.f32.mrf.mxu0
    %v145 = vadd.f32 %v61, %v144
    %146 = vmatmul.f32.gmra.mxu0 %v83
    %v147 = vpop.f32.mrf.mxu0
    %v148 = vadd.f32 %v61, %v147
    %149 = vmatmul.f32.gmra.mxu0 %v86
    %v150 = vpop.f32.mrf.mxu0
    %v151 = vadd.f32 %v61, %v150
    %152 = vmatmul.f32.gmra.mxu0 %v89
    %v153 = vpop.f32.mrf.mxu0
    %v154 = vadd.f32 %v61, %v153
    %155 = vmatmul.f32.gmra.mxu0 %v92
    %v156 = vpop.f32.mrf.mxu0
    %v157 = vadd.f32 %v61, %v156
    %158 = vmatmul.f32.gmra.mxu0 %v95
    %v159 = vpop.f32.mrf.mxu0
    %v160 = vadd.f32 %v61, %v159
    %161 = vmatmul.f32.gmra.mxu0 %v98
    %v162 = vpop.f32.mrf.mxu0
    %v163 = vadd.f32 %v61, %v162
    %164 = vmatmul.f32.gmra.mxu0 %v101
    %v165 = vpop.f32.mrf.mxu0
    %v166 = vadd.f32 %v61, %v165
    %167 = vmatmul.f32.gmra.mxu0 %v104
    %v168 = vpop.f32.mrf.mxu0
    %v169 = vadd.f32 %v61, %v168
    %170 = vmatmul.f32.gmra.mxu0 %v107
    %v171 = vpop.f32.mrf.mxu0
    %v172 = vadd.f32 %v61, %v171
    %173 = vmatmul.f32.gmra.mxu0 %v110
    %v174 = vpop.f32.mrf.mxu0
    %v175 = vadd.f32 %v61, %v174
    %176 = vdwg.mxu0
    %193 = vrot.lane.b32.xlu0 %v130, 96
    %v194 = vpop.permute.xlu0 %193
    %195 = vrot.lane.b32.xlu0 %v133, 96
    %v196 = vpop.permute.xlu0 %195
    %197 = vrot.lane.b32.xlu0 %v136, 96
    %v198 = vpop.permute.xlu0 %197
    %199 = vrot.lane.b32.xlu0 %v139, 96
    %v200 = vpop.permute.xlu0 %199
    %201 = vrot.lane.b32.xlu0 %v142, 96
    %v202 = vpop.permute.xlu0 %201
    %203 = vrot.lane.b32.xlu0 %v145, 96
    %v204 = vpop.permute.xlu0 %203
    %205 = vrot.lane.b32.xlu0 %v148, 96
    %v206 = vpop.permute.xlu0 %205
    %207 = vrot.lane.b32.xlu0 %v151, 96
    %v208 = vpop.permute.xlu0 %207
    %209 = vrot.lane.b32.xlu0 %v154, 96
    %v210 = vpop.permute.xlu0 %209
    %211 = vrot.lane.b32.xlu0 %v157, 96
    %v212 = vpop.permute.xlu0 %211
    %213 = vrot.lane.b32.xlu0 %v160, 96
    %v214 = vpop.permute.xlu0 %213
    %215 = vrot.lane.b32.xlu0 %v163, 96
    %v216 = vpop.permute.xlu0 %215
    %217 = vrot.lane.b32.xlu0 %v166, 96
    %v218 = vpop.permute.xlu0 %217
    %219 = vrot.lane.b32.xlu0 %v169, 96
    %v220 = vpop.permute.xlu0 %219
    %221 = vrot.lane.b32.xlu0 %v172, 96
    %v222 = vpop.permute.xlu0 %221
    %223 = vrot.lane.b32.xlu0 %v175, 96
    %v224 = vpop.permute.xlu0 %223
    %241 = vxpose.xlu0.b32.start [1/16] %v194, 128
    %242 = vxpose.xlu0.b32.cont [2/16] %v196, 128
    %243 = vxpose.xlu0.b32.cont [3/16] %v198, 128
    %244 = vxpose.xlu0.b32.cont [4/16] %v200, 128
    %245 = vxpose.xlu0.b32.cont [5/16] %v202, 128
    %246 = vxpose.xlu0.b32.cont [6/16] %v204, 128
    %247 = vxpose.xlu0.b32.cont [7/16] %v206, 128
    %248 = vxpose.xlu0.b32.cont [8/16] %v208, 128
    %249 = vxpose.xlu0.b32.cont [9/16] %v210, 128
    %250 = vxpose.xlu0.b32.cont [10/16] %v212, 128
    %251 = vxpose.xlu0.b32.cont [11/16] %v214, 128
    %252 = vxpose.xlu0.b32.cont [12/16] %v216, 128
    %253 = vxpose.xlu0.b32.cont [13/16] %v218, 128
    %254 = vxpose.xlu0.b32.cont [14/16] %v220, 128
    %255 = vxpose.xlu0.b32.cont [15/16] %v222, 128
    %256 = vxpose.xlu0.b32.end [16/16] %v224, 128
    %v257 = vpop.trf.xlu0
    %v258 = vpop.trf.xlu0
    %v259 = vpop.trf.xlu0
    %v260 = vpop.trf.xlu0
    %v261 = vpop.trf.xlu0
    %v262 = vpop.trf.xlu0
    %v263 = vpop.trf.xlu0
    %v264 = vpop.trf.xlu0
    %v265 = vpop.trf.xlu0
    %v266 = vpop.trf.xlu0
    %v267 = vpop.trf.xlu0
    %v268 = vpop.trf.xlu0
    %v269 = vpop.trf.xlu0
    %v270 = vpop.trf.xlu0
    %v271 = vpop.trf.xlu0
    %v272 = vpop.trf.xlu0
    %273 = vst [vmem:[#allocation2] sm:$0xff] 0.0
    %274 = vst [vmem:[#allocation2 + $0x8] sm:$0xff] 0.0
    %275 = vst [vmem:[#allocation2 + $0x10] sm:$0xff] 0.0
    %276 = vst [vmem:[#allocation2 + $0x18] sm:$0xff] 0.0
    %277 = vst [vmem:[#allocation2 + $0x20] sm:$0xff] 0.0
    %278 = vst [vmem:[#allocation2 + $0x28] sm:$0xff] 0.0
    %279 = vst [vmem:[#allocation2 + $0x30] sm:$0xff] 0.0
    %280 = vst [vmem:[#allocation2 + $0x38] sm:$0xff] 0.0
    %281 = vst [vmem:[#allocation2 + $0x40] sm:$0xff] 0.0
    %282 = vst [vmem:[#allocation2 + $0x48] sm:$0xff] 0.0
    %283 = vst [vmem:[#allocation2 + $0x50] sm:$0xff] 0.0
    %284 = vst [vmem:[#allocation2 + $0x58] sm:$0xff] 0.0
    %285 = vst [vmem:[#allocation2 + $0x60] sm:$0xff] 0.0
    %286 = vst [vmem:[#allocation2 + $0x68] sm:$0xff] 0.0
    %287 = vst [vmem:[#allocation2 + $0x70] sm:$0xff] 0.0
    %288 = vst [vmem:[#allocation2 + $0x78] sm:$0xff] 0.0
    %289 = vst.msk [vmem:[#allocation3] sm:$0xff] %vm63, 0.0
    %290 = vst.msk [vmem:[#allocation3 + $0x8] sm:$0xff] %vm63, 0.0
    %291 = vst.msk [vmem:[#allocation3 + $0x10] sm:$0xff] %vm63, 0.0
    %292 = vst.msk [vmem:[#allocation3 + $0x18] sm:$0xff] %vm63, 0.0
    %293 = vst.msk [vmem:[#allocation3 + $0x20] sm:$0xff] %vm63, 0.0
    %294 = vst.msk [vmem:[#allocation3 + $0x28] sm:$0xff] %vm63, 0.0
    %295 = vst.msk [vmem:[#allocation3 + $0x30] sm:$0xff] %vm63, 0.0
    %296 = vst.msk [vmem:[#allocation3 + $0x38] sm:$0xff] %vm63, 0.0
    %297 = vst.msk [vmem:[#allocation3 + $0x40] sm:$0xff] %vm63, 0.0
    %298 = vst.msk [vmem:[#allocation3 + $0x48] sm:$0xff] %vm63, 0.0
    %299 = vst.msk [vmem:[#allocation3 + $0x50] sm:$0xff] %vm63, 0.0
    %300 = vst.msk [vmem:[#allocation3 + $0x58] sm:$0xff] %vm63, 0.0
    %301 = vst.msk [vmem:[#allocation3 + $0x60] sm:$0xff] %vm63, 0.0
    %302 = vst.msk [vmem:[#allocation3 + $0x68] sm:$0xff] %vm63, 0.0
    %303 = vst.msk [vmem:[#allocation3 + $0x70] sm:$0xff] %vm63, 0.0
    %304 = vst.msk [vmem:[#allocation3 + $0x78] sm:$0xff] %vm63, 0.0
    %305 = vst.msk [vmem:[#allocation3 + $0x80] sm:$0xff] %vm63, 0.0
    %306 = vst.msk [vmem:[#allocation3 + $0x88] sm:$0xff] %vm63, 0.0
    %307 = vst.msk [vmem:[#allocation3 + $0x90] sm:$0xff] %vm63, 0.0
    %308 = vst.msk [vmem:[#allocation3 + $0x98] sm:$0xff] %vm63, 0.0
    %309 = vst.msk [vmem:[#allocation3 + $0xa0] sm:$0xff] %vm63, 0.0
    %310 = vst.msk [vmem:[#allocation3 + $0xa8] sm:$0xff] %vm63, 0.0
    %311 = vst.msk [vmem:[#allocation3 + $0xb0] sm:$0xff] %vm63, 0.0
    %312 = vst.msk [vmem:[#allocation3 + $0xb8] sm:$0xff] %vm63, 0.0
    %313 = vst.msk [vmem:[#allocation3 + $0xc0] sm:$0xff] %vm63, 0.0
    %314 = vst.msk [vmem:[#allocation3 + $0xc8] sm:$0xff] %vm63, 0.0
    %315 = vst.msk [vmem:[#allocation3 + $0xd0] sm:$0xff] %vm63, 0.0
    %316 = vst.msk [vmem:[#allocation3 + $0xd8] sm:$0xff] %vm63, 0.0
    %317 = vst.msk [vmem:[#allocation3 + $0xe0] sm:$0xff] %vm63, 0.0
    %318 = vst.msk [vmem:[#allocation3 + $0xe8] sm:$0xff] %vm63, 0.0
    %319 = vst.msk [vmem:[#allocation3 + $0xf0] sm:$0xff] %vm63, 0.0
    %320 = vst.msk [vmem:[#allocation3 + $0xf8] sm:$0xff] %vm63, 0.0
    %321 = vst.msk [vmem:[#allocation3 + $0x100] sm:$0xff] %vm63, 0.0
    %322 = vst.msk [vmem:[#allocation3 + $0x108] sm:$0xff] %vm63, 0.0
    %323 = vst.msk [vmem:[#allocation3 + $0x110] sm:$0xff] %vm63, 0.0
    %324 = vst.msk [vmem:[#allocation3 + $0x118] sm:$0xff] %vm63, 0.0
    %325 = vst.msk [vmem:[#allocation3 + $0x120] sm:$0xff] %vm63, 0.0
    %326 = vst.msk [vmem:[#allocation3 + $0x128] sm:$0xff] %vm63, 0.0
    %327 = vst.msk [vmem:[#allocation3 + $0x130] sm:$0xff] %vm63, 0.0
    %328 = vst.msk [vmem:[#allocation3 + $0x138] sm:$0xff] %vm63, 0.0
    %329 = vst.msk [vmem:[#allocation3 + $0x140] sm:$0xff] %vm63, 0.0
    %330 = vst.msk [vmem:[#allocation3 + $0x148] sm:$0xff] %vm63, 0.0
    %331 = vst.msk [vmem:[#allocation3 + $0x150] sm:$0xff] %vm63, 0.0
    %332 = vst.msk [vmem:[#allocation3 + $0x158] sm:$0xff] %vm63, 0.0
    %333 = vst.msk [vmem:[#allocation3 + $0x160] sm:$0xff] %vm63, 0.0
    %334 = vst.msk [vmem:[#allocation3 + $0x168] sm:$0xff] %vm63, 0.0
    %335 = vst.msk [vmem:[#allocation3 + $0x170] sm:$0xff] %vm63, 0.0
    %336 = vst.msk [vmem:[#allocation3 + $0x178] sm:$0xff] %vm63, 0.0
    %337 = vst.msk [vmem:[#allocation3 + $0x180] sm:$0xff] %vm63, 0.0
    %338 = vst.msk [vmem:[#allocation3 + $0x188] sm:$0xff] %vm63, 0.0
    %339 = vst.msk [vmem:[#allocation3 + $0x190] sm:$0xff] %vm63, 0.0
    %340 = vst.msk [vmem:[#allocation3 + $0x198] sm:$0xff] %vm63, 0.0
    %341 = vst.msk [vmem:[#allocation3 + $0x1a0] sm:$0xff] %vm63, 0.0
    %342 = vst.msk [vmem:[#allocation3 + $0x1a8] sm:$0xff] %vm63, 0.0
    %343 = vst.msk [vmem:[#allocation3 + $0x1b0] sm:$0xff] %vm63, 0.0
    %344 = vst.msk [vmem:[#allocation3 + $0x1b8] sm:$0xff] %vm63, 0.0
    %345 = vst.msk [vmem:[#allocation3 + $0x1c0] sm:$0xff] %vm63, 0.0
    %346 = vst.msk [vmem:[#allocation3 + $0x1c8] sm:$0xff] %vm63, 0.0
    %347 = vst.msk [vmem:[#allocation3 + $0x1d0] sm:$0xff] %vm63, 0.0
    %348 = vst.msk [vmem:[#allocation3 + $0x1d8] sm:$0xff] %vm63, 0.0
    %349 = vst.msk [vmem:[#allocation3 + $0x1e0] sm:$0xff] %vm63, 0.0
    %350 = vst.msk [vmem:[#allocation3 + $0x1e8] sm:$0xff] %vm63, 0.0
    %351 = vst.msk [vmem:[#allocation3 + $0x1f0] sm:$0xff] %vm63, 0.0
    %352 = vst.msk [vmem:[#allocation3 + $0x1f8] sm:$0xff] %vm63, 0.0
    %353 = vst [vmem:[#allocation2] sm:$0xff] %v257
    %354 = vrot.lane.b32.xlu0 %v130, 64
    %v355 = vpop.permute.xlu0 %354
    %356 = vrot.lane.b32.xlu0 %v133, 64
    %v357 = vpop.permute.xlu0 %356
    %358 = vrot.lane.b32.xlu0 %v136, 64
    %v359 = vpop.permute.xlu0 %358
    %360 = vrot.lane.b32.xlu0 %v139, 64
    %v361 = vpop.permute.xlu0 %360
    %362 = vrot.lane.b32.xlu0 %v142, 64
    %v363 = vpop.permute.xlu0 %362
    %364 = vrot.lane.b32.xlu0 %v145, 64
    %v365 = vpop.permute.xlu0 %364
    %366 = vrot.lane.b32.xlu0 %v148, 64
    %v367 = vpop.permute.xlu0 %366
    %368 = vrot.lane.b32.xlu0 %v151, 64
    %v369 = vpop.permute.xlu0 %368
    %370 = vrot.lane.b32.xlu0 %v154, 64
    %v371 = vpop.permute.xlu0 %370
    %372 = vrot.lane.b32.xlu0 %v157, 64
    %v373 = vpop.permute.xlu0 %372
    %374 = vrot.lane.b32.xlu0 %v160, 64
    %v375 = vpop.permute.xlu0 %374
    %376 = vrot.lane.b32.xlu0 %v163, 64
    %v377 = vpop.permute.xlu0 %376
    %378 = vrot.lane.b32.xlu0 %v166, 64
    %v379 = vpop.permute.xlu0 %378
    %380 = vrot.lane.b32.xlu0 %v169, 64
    %v381 = vpop.permute.xlu0 %380
    %382 = vrot.lane.b32.xlu0 %v172, 64
    %v383 = vpop.permute.xlu0 %382
    %384 = vrot.lane.b32.xlu0 %v175, 64
    %v385 = vpop.permute.xlu0 %384
    %vm402 = vcmask 64512
    %403 = vst.msk [vmem:[#allocation3] sm:$0xff] %vm402, %v355
    %404 = vst.msk [vmem:[#allocation3 + $0x8] sm:$0xff] %vm402, %v357
    %405 = vst.msk [vmem:[#allocation3 + $0x10] sm:$0xff] %vm402, %v359
    %406 = vst.msk [vmem:[#allocation3 + $0x18] sm:$0xff] %vm402, %v361
    %407 = vst.msk [vmem:[#allocation3 + $0x20] sm:$0xff] %vm402, %v363
    %408 = vst.msk [vmem:[#allocation3 + $0x28] sm:$0xff] %vm402, %v365
    %409 = vst.msk [vmem:[#allocation3 + $0x30] sm:$0xff] %vm402, %v367
    %410 = vst.msk [vmem:[#allocation3 + $0x38] sm:$0xff] %vm402, %v369
    %411 = vst.msk [vmem:[#allocation3 + $0x40] sm:$0xff] %vm402, %v371
    %412 = vst.msk [vmem:[#allocation3 + $0x48] sm:$0xff] %vm402, %v373
    %413 = vst.msk [vmem:[#allocation3 + $0x50] sm:$0xff] %vm402, %v375
    %414 = vst.msk [vmem:[#allocation3 + $0x58] sm:$0xff] %vm402, %v377
    %415 = vst.msk [vmem:[#allocation3 + $0x60] sm:$0xff] %vm402, %v379
    %416 = vst.msk [vmem:[#allocation3 + $0x68] sm:$0xff] %vm402, %v381
    %417 = vst.msk [vmem:[#allocation3 + $0x70] sm:$0xff] %vm402, %v383
    %418 = vst.msk [vmem:[#allocation3 + $0x78] sm:$0xff] %vm402, %v385
    %419 = vst [vmem:[#allocation2 + $0x28] sm:$0xff] %v258
    %vm420 = vcmask 130112
    %421 = vst.msk [vmem:[#allocation3 + $0x80] sm:$0xff] %vm420, %v355
    %422 = vst.msk [vmem:[#allocation3 + $0x88] sm:$0xff] %vm420, %v357
    %423 = vst.msk [vmem:[#allocation3 + $0x90] sm:$0xff] %vm420, %v359
    %424 = vst.msk [vmem:[#allocation3 + $0x98] sm:$0xff] %vm420, %v361
    %425 = vst.msk [vmem:[#allocation3 + $0xa0] sm:$0xff] %vm420, %v363
    %426 = vst.msk [vmem:[#allocation3 + $0xa8] sm:$0xff] %vm420, %v365
    %427 = vst.msk [vmem:[#allocation3 + $0xb0] sm:$0xff] %vm420, %v367
    %428 = vst.msk [vmem:[#allocation3 + $0xb8] sm:$0xff] %vm420, %v369
    %429 = vst.msk [vmem:[#allocation3 + $0xc0] sm:$0xff] %vm420, %v371
    %430 = vst.msk [vmem:[#allocation3 + $0xc8] sm:$0xff] %vm420, %v373
    %431 = vst.msk [vmem:[#allocation3 + $0xd0] sm:$0xff] %vm420, %v375
    %432 = vst.msk [vmem:[#allocation3 + $0xd8] sm:$0xff] %vm420, %v377
    %433 = vst.msk [vmem:[#allocation3 + $0xe0] sm:$0xff] %vm420, %v379
    %434 = vst.msk [vmem:[#allocation3 + $0xe8] sm:$0xff] %vm420, %v381
    %435 = vst.msk [vmem:[#allocation3 + $0xf0] sm:$0xff] %vm420, %v383
    %436 = vst.msk [vmem:[#allocation3 + $0xf8] sm:$0xff] %vm420, %v385
    %437 = vst [vmem:[#allocation2 + $0x50] sm:$0xff] %v259
    %vm438 = vcmask 195712
    %439 = vst.msk [vmem:[#allocation3 + $0x100] sm:$0xff] %vm438, %v355
    %440 = vst.msk [vmem:[#allocation3 + $0x108] sm:$0xff] %vm438, %v357
    %441 = vst.msk [vmem:[#allocation3 + $0x110] sm:$0xff] %vm438, %v359
    %442 = vst.msk [vmem:[#allocation3 + $0x118] sm:$0xff] %vm438, %v361
    %443 = vst.msk [vmem:[#allocation3 + $0x120] sm:$0xff] %vm438, %v363
    %444 = vst.msk [vmem:[#allocation3 + $0x128] sm:$0xff] %vm438, %v365
    %445 = vst.msk [vmem:[#allocation3 + $0x130] sm:$0xff] %vm438, %v367
    %446 = vst.msk [vmem:[#allocation3 + $0x138] sm:$0xff] %vm438, %v369
    %447 = vst.msk [vmem:[#allocation3 + $0x140] sm:$0xff] %vm438, %v371
    %448 = vst.msk [vmem:[#allocation3 + $0x148] sm:$0xff] %vm438, %v373
    %449 = vst.msk [vmem:[#allocation3 + $0x150] sm:$0xff] %vm438, %v375
    %450 = vst.msk [vmem:[#allocation3 + $0x158] sm:$0xff] %vm438, %v377
    %451 = vst.msk [vmem:[#allocation3 + $0x160] sm:$0xff] %vm438, %v379
    %452 = vst.msk [vmem:[#allocation3 + $0x168] sm:$0xff] %vm438, %v381
    %453 = vst.msk [vmem:[#allocation3 + $0x170] sm:$0xff] %vm438, %v383
    %454 = vst.msk [vmem:[#allocation3 + $0x178] sm:$0xff] %vm438, %v385
    %455 = vst [vmem:[#allocation2 + $0x78] sm:$0xff] %v260
    %vm456 = vcmask 261312
    %457 = vst.msk [vmem:[#allocation3 + $0x180] sm:$0xff] %vm456, %v355
    %458 = vst.msk [vmem:[#allocation3 + $0x188] sm:$0xff] %vm456, %v357
    %459 = vst.msk [vmem:[#allocation3 + $0x190] sm:$0xff] %vm456, %v359
    %460 = vst.msk [vmem:[#allocation3 + $0x198] sm:$0xff] %vm456, %v361
    %461 = vst.msk [vmem:[#allocation3 + $0x1a0] sm:$0xff] %vm456, %v363
    %462 = vst.msk [vmem:[#allocation3 + $0x1a8] sm:$0xff] %vm456, %v365
    %463 = vst.msk [vmem:[#allocation3 + $0x1b0] sm:$0xff] %vm456, %v367
    %464 = vst.msk [vmem:[#allocation3 + $0x1b8] sm:$0xff] %vm456, %v369
    %465 = vst.msk [vmem:[#allocation3 + $0x1c0] sm:$0xff] %vm456, %v371
    %466 = vst.msk [vmem:[#allocation3 + $0x1c8] sm:$0xff] %vm456, %v373
    %467 = vst.msk [vmem:[#allocation3 + $0x1d0] sm:$0xff] %vm456, %v375
    %468 = vst.msk [vmem:[#allocation3 + $0x1d8] sm:$0xff] %vm456, %v377
    %469 = vst.msk [vmem:[#allocation3 + $0x1e0] sm:$0xff] %vm456, %v379
    %470 = vst.msk [vmem:[#allocation3 + $0x1e8] sm:$0xff] %vm456, %v381
    %471 = vst.msk [vmem:[#allocation3 + $0x1f0] sm:$0xff] %vm456, %v383
    %472 = vst.msk [vmem:[#allocation3 + $0x1f8] sm:$0xff] %vm456, %v385
    %v473 = vld [vmem:[#allocation2] sm:$0xff]
    %v474 = vld [vmem:[#allocation2 + $0x8] sm:$0xff]
    %v475 = vld [vmem:[#allocation2 + $0x10] sm:$0xff]
    %v476 = vld [vmem:[#allocation2 + $0x18] sm:$0xff]
    %v477 = vld [vmem:[#allocation2 + $0x20] sm:$0xff]
    %v478 = vld [vmem:[#allocation2 + $0x28] sm:$0xff]
    %v479 = vld [vmem:[#allocation2 + $0x30] sm:$0xff]
    %v480 = vld [vmem:[#allocation2 + $0x38] sm:$0xff]
    %v481 = vld [vmem:[#allocation2 + $0x40] sm:$0xff]
    %v482 = vld [vmem:[#allocation2 + $0x48] sm:$0xff]
    %v483 = vld [vmem:[#allocation2 + $0x50] sm:$0xff]
    %v484 = vld [vmem:[#allocation2 + $0x58] sm:$0xff]
    %v485 = vld [vmem:[#allocation2 + $0x60] sm:$0xff]
    %v486 = vld [vmem:[#allocation2 + $0x68] sm:$0xff]
    %v487 = vld [vmem:[#allocation2 + $0x70] sm:$0xff]
    %v488 = vld [vmem:[#allocation2 + $0x78] sm:$0xff]
    %v489 = vld [vmem:[#allocation4] sm:$0xff]
    %v490 = vld [vmem:[#allocation4 + $0x8] sm:$0xff]
    %v491 = vld [vmem:[#allocation4 + $0x10] sm:$0xff]
    %v492 = vld [vmem:[#allocation4 + $0x18] sm:$0xff]
    %v493 = vld [vmem:[#allocation4 + $0x20] sm:$0xff]
    %v494 = vld [vmem:[#allocation4 + $0x28] sm:$0xff]
    %v495 = vld [vmem:[#allocation4 + $0x30] sm:$0xff]
    %v496 = vld [vmem:[#allocation4 + $0x38] sm:$0xff]
    %v497 = vld [vmem:[#allocation4 + $0x40] sm:$0xff]
    %v498 = vld [vmem:[#allocation4 + $0x48] sm:$0xff]
    %v499 = vld [vmem:[#allocation4 + $0x50] sm:$0xff]
    %v500 = vld [vmem:[#allocation4 + $0x58] sm:$0xff]
    %v501 = vld [vmem:[#allocation4 + $0x60] sm:$0xff]
    %v502 = vld [vmem:[#allocation4 + $0x68] sm:$0xff]
    %v503 = vld [vmem:[#allocation4 + $0x70] sm:$0xff]
    %v504 = vld [vmem:[#allocation4 + $0x78] sm:$0xff]
    %v505 = vld [vmem:[#allocation4 + $0x80] sm:$0xff]
    %v506 = vld [vmem:[#allocation4 + $0x88] sm:$0xff]
    %v507 = vld [vmem:[#allocation4 + $0x90] sm:$0xff]
    %v508 = vld [vmem:[#allocation4 + $0x98] sm:$0xff]
    %v509 = vld [vmem:[#allocation4 + $0xa0] sm:$0xff]
    %v510 = vld [vmem:[#allocation4 + $0xa8] sm:$0xff]
    %v511 = vld [vmem:[#allocation4 + $0xb0] sm:$0xff]
    %v512 = vld [vmem:[#allocation4 + $0xb8] sm:$0xff]
    %v513 = vld [vmem:[#allocation4 + $0xc0] sm:$0xff]
    %v514 = vld [vmem:[#allocation4 + $0xc8] sm:$0xff]
    %v515 = vld [vmem:[#allocation4 + $0xd0] sm:$0xff]
    %v516 = vld [vmem:[#allocation4 + $0xd8] sm:$0xff]
    %v517 = vld [vmem:[#allocation4 + $0xe0] sm:$0xff]
    %v518 = vld [vmem:[#allocation4 + $0xe8] sm:$0xff]
    %v519 = vld [vmem:[#allocation4 + $0xf0] sm:$0xff]
    %v520 = vld [vmem:[#allocation4 + $0xf8] sm:$0xff]
    %v521 = vld [vmem:[#allocation4 + $0x100] sm:$0xff]
    %v522 = vld [vmem:[#allocation4 + $0x108] sm:$0xff]
    %v523 = vld [vmem:[#allocation4 + $0x110] sm:$0xff]
    %v524 = vld [vmem:[#allocation4 + $0x118] sm:$0xff]
    %v525 = vld [vmem:[#allocation4 + $0x120] sm:$0xff]
    %v526 = vld [vmem:[#allocation4 + $0x128] sm:$0xff]
    %v527 = vld [vmem:[#allocation4 + $0x130] sm:$0xff]
    %v528 = vld [vmem:[#allocation4 + $0x138] sm:$0xff]
    %v529 = vld [vmem:[#allocation4 + $0x140] sm:$0xff]
    %v530 = vld [vmem:[#allocation4 + $0x148] sm:$0xff]
    %v531 = vld [vmem:[#allocation4 + $0x150] sm:$0xff]
    %v532 = vld [vmem:[#allocation4 + $0x158] sm:$0xff]
    %v533 = vld [vmem:[#allocation4 + $0x160] sm:$0xff]
    %v534 = vld [vmem:[#allocation4 + $0x168] sm:$0xff]
    %v535 = vld [vmem:[#allocation4 + $0x170] sm:$0xff]
    %v536 = vld [vmem:[#allocation4 + $0x178] sm:$0xff]
    %v537 = vld [vmem:[#allocation4 + $0x180] sm:$0xff]
    %v538 = vld [vmem:[#allocation4 + $0x188] sm:$0xff]
    %v539 = vld [vmem:[#allocation4 + $0x190] sm:$0xff]
    %v540 = vld [vmem:[#allocation4 + $0x198] sm:$0xff]
    %v541 = vld [vmem:[#allocation4 + $0x1a0] sm:$0xff]
    %v542 = vld [vmem:[#allocation4 + $0x1a8] sm:$0xff]
    %v543 = vld [vmem:[#allocation4 + $0x1b0] sm:$0xff]
    %v544 = vld [vmem:[#allocation4 + $0x1b8] sm:$0xff]
    %v545 = vld [vmem:[#allocation4 + $0x1c0] sm:$0xff]
    %v546 = vld [vmem:[#allocation4 + $0x1c8] sm:$0xff]
    %v547 = vld [vmem:[#allocation4 + $0x1d0] sm:$0xff]
    %v548 = vld [vmem:[#allocation4 + $0x1d8] sm:$0xff]
    %v549 = vld [vmem:[#allocation4 + $0x1e0] sm:$0xff]
    %v550 = vld [vmem:[#allocation4 + $0x1e8] sm:$0xff]
    %v551 = vld [vmem:[#allocation4 + $0x1f0] sm:$0xff]
    %v552 = vld [vmem:[#allocation4 + $0x1f8] sm:$0xff]
    %v553 = vsel %vm63, %v130, 0
    %v555 = vsel %vm63, %v133, 0
    %v557 = vsel %vm63, %v136, 0
    %v559 = vsel %vm63, %v139, 0
    %v561 = vsel %vm63, %v142, 0
    %v563 = vsel %vm63, %v145, 0
    %v565 = vsel %vm63, %v148, 0
    %v567 = vsel %vm63, %v151, 0
    %v569 = vsel %vm63, %v154, 0
    %v571 = vsel %vm63, %v157, 0
    %v573 = vsel %vm63, %v160, 0
    %v575 = vsel %vm63, %v163, 0
    %v577 = vsel %vm63, %v166, 0
    %v579 = vsel %vm63, %v169, 0
    %v581 = vsel %vm63, %v172, 0
    %v583 = vsel %vm63, %v175, 0
    %585 = vmatpush.msra.mxu0 0.0
    %586 = vmatpush.msra.mxu0 0.0
    %587 = vmatpush.msra.mxu0 0.0
    %588 = vmatpush.msra.mxu0 0.0
    %589 = vmatpush.msra.mxu0 0.0
    %590 = vmatpush.msra.mxu0 0.0
    %591 = vmatpush.msra.mxu0 0.0
    %592 = vmatpush.msra.mxu0 0.0
    %593 = vmatpush.msra.mxu0 0.0
    %594 = vmatpush.msra.mxu0 0.0
    %595 = vmatpush.msra.mxu0 0.0
    %596 = vmatpush.msra.mxu0 0.0
    %597 = vmatpush.msra.mxu0 %v485
    %598 = vmatpush.msra.mxu0 %v481
    %599 = vmatpush.msra.mxu0 %v477
    %600 = vmatpush.msra.mxu0 %v473
    %601 = vmatmul.f32.gmra.mxu0 %v553
    %v602 = vpop.f32.mrf.mxu0
    %v603 = vadd.f32 %v489, %v602
    %604 = vmatmul.f32.gmra.mxu0 %v555
    %v605 = vpop.f32.mrf.mxu0
    %v606 = vadd.f32 %v493, %v605
    %607 = vmatmul.f32.gmra.mxu0 %v557
    %v608 = vpop.f32.mrf.mxu0
    %v609 = vadd.f32 %v497, %v608
    %610 = vmatmul.f32.gmra.mxu0 %v559
    %v611 = vpop.f32.mrf.mxu0
    %v612 = vadd.f32 %v501, %v611
    %613 = vmatmul.f32.gmra.mxu0 %v561
    %v614 = vpop.f32.mrf.mxu0
    %v615 = vadd.f32 %v505, %v614
    %616 = vmatmul.f32.gmra.mxu0 %v563
    %v617 = vpop.f32.mrf.mxu0
    %v618 = vadd.f32 %v509, %v617
    %619 = vmatmul.f32.gmra.mxu0 %v565
    %v620 = vpop.f32.mrf.mxu0
    %v621 = vadd.f32 %v513, %v620
    %622 = vmatmul.f32.gmra.mxu0 %v567
    %v623 = vpop.f32.mrf.mxu0
    %v624 = vadd.f32 %v517, %v623
    %625 = vmatmul.f32.gmra.mxu0 %v569
    %v626 = vpop.f32.mrf.mxu0
    %v627 = vadd.f32 %v521, %v626
    %628 = vmatmul.f32.gmra.mxu0 %v571
    %v629 = vpop.f32.mrf.mxu0
    %v630 = vadd.f32 %v525, %v629
    %631 = vmatmul.f32.gmra.mxu0 %v573
    %v632 = vpop.f32.mrf.mxu0
    %v633 = vadd.f32 %v529, %v632
    %634 = vmatmul.f32.gmra.mxu0 %v575
    %v635 = vpop.f32.mrf.mxu0
    %v636 = vadd.f32 %v533, %v635
    %637 = vmatmul.f32.gmra.mxu0 %v577
    %v638 = vpop.f32.mrf.mxu0
    %v639 = vadd.f32 %v537, %v638
    %640 = vmatmul.f32.gmra.mxu0 %v579
    %v641 = vpop.f32.mrf.mxu0
    %v642 = vadd.f32 %v541, %v641
    %643 = vmatmul.f32.gmra.mxu0 %v581
    %v644 = vpop.f32.mrf.mxu0
    %v645 = vadd.f32 %v545, %v644
    %646 = vmatmul.f32.gmra.mxu0 %v583
    %v647 = vpop.f32.mrf.mxu0
    %v648 = vadd.f32 %v549, %v647
    %649 = vdwg.mxu0
    %650 = vmatpush.msra.mxu0 0.0
    %651 = vmatpush.msra.mxu0 0.0
    %652 = vmatpush.msra.mxu0 0.0
    %653 = vmatpush.msra.mxu0 0.0
    %654 = vmatpush.msra.mxu0 0.0
    %655 = vmatpush.msra.mxu0 0.0
    %656 = vmatpush.msra.mxu0 0.0
    %657 = vmatpush.msra.mxu0 0.0
    %658 = vmatpush.msra.mxu0 0.0
    %659 = vmatpush.msra.mxu0 0.0
    %660 = vmatpush.msra.mxu0 0.0
    %661 = vmatpush.msra.mxu0 0.0
    %662 = vmatpush.msra.mxu0 %v486
    %663 = vmatpush.msra.mxu0 %v482
    %664 = vmatpush.msra.mxu0 %v478
    %665 = vmatpush.msra.mxu0 %v474
    %666 = vmatmul.f32.gmra.mxu0 %v553
    %v667 = vpop.f32.mrf.mxu0
    %v668 = vadd.f32 %v490, %v667
    %669 = vmatmul.f32.gmra.mxu0 %v555
    %v670 = vpop.f32.mrf.mxu0
    %v671 = vadd.f32 %v494, %v670
    %672 = vmatmul.f32.gmra.mxu0 %v557
    %v673 = vpop.f32.mrf.mxu0
    %v674 = vadd.f32 %v498, %v673
    %675 = vmatmul.f32.gmra.mxu0 %v559
    %v676 = vpop.f32.mrf.mxu0
    %v677 = vadd.f32 %v502, %v676
    %678 = vmatmul.f32.gmra.mxu0 %v561
    %v679 = vpop.f32.mrf.mxu0
    %v680 = vadd.f32 %v506, %v679
    %681 = vmatmul.f32.gmra.mxu0 %v563
    %v682 = vpop.f32.mrf.mxu0
    %v683 = vadd.f32 %v510, %v682
    %684 = vmatmul.f32.gmra.mxu0 %v565
    %v685 = vpop.f32.mrf.mxu0
    %v686 = vadd.f32 %v514, %v685
    %687 = vmatmul.f32.gmra.mxu0 %v567
    %v688 = vpop.f32.mrf.mxu0
    %v689 = vadd.f32 %v518, %v688
    %690 = vmatmul.f32.gmra.mxu0 %v569
    %v691 = vpop.f32.mrf.mxu0
    %v692 = vadd.f32 %v522, %v691
    %693 = vmatmul.f32.gmra.mxu0 %v571
    %v694 = vpop.f32.mrf.mxu0
    %v695 = vadd.f32 %v526, %v694
    %696 = vmatmul.f32.gmra.mxu0 %v573
    %v697 = vpop.f32.mrf.mxu0
    %v698 = vadd.f32 %v530, %v697
    %699 = vmatmul.f32.gmra.mxu0 %v575
    %v700 = vpop.f32.mrf.mxu0
    %v701 = vadd.f32 %v534, %v700
    %702 = vmatmul.f32.gmra.mxu0 %v577
    %v703 = vpop.f32.mrf.mxu0
    %v704 = vadd.f32 %v538, %v703
    %705 = vmatmul.f32.gmra.mxu0 %v579
    %v706 = vpop.f32.mrf.mxu0
    %v707 = vadd.f32 %v542, %v706
    %708 = vmatmul.f32.gmra.mxu0 %v581
    %v709 = vpop.f32.mrf.mxu0
    %v710 = vadd.f32 %v546, %v709
    %711 = vmatmul.f32.gmra.mxu0 %v583
    %v712 = vpop.f32.mrf.mxu0
    %v713 = vadd.f32 %v550, %v712
    %714 = vdwg.mxu0
    %715 = vmatpush.msra.mxu0 0.0
    %716 = vmatpush.msra.mxu0 0.0
    %717 = vmatpush.msra.mxu0 0.0
    %718 = vmatpush.msra.mxu0 0.0
    %719 = vmatpush.msra.mxu0 0.0
    %720 = vmatpush.msra.mxu0 0.0
    %721 = vmatpush.msra.mxu0 0.0
    %722 = vmatpush.msra.mxu0 0.0
    %723 = vmatpush.msra.mxu0 0.0
    %724 = vmatpush.msra.mxu0 0.0
    %725 = vmatpush.msra.mxu0 0.0
    %726 = vmatpush.msra.mxu0 0.0
    %727 = vmatpush.msra.mxu0 %v487
    %728 = vmatpush.msra.mxu0 %v483
    %729 = vmatpush.msra.mxu0 %v479
    %730 = vmatpush.msra.mxu0 %v475
    %731 = vmatmul.f32.gmra.mxu0 %v553
    %v732 = vpop.f32.mrf.mxu0
    %v733 = vadd.f32 %v491, %v732
    %734 = vmatmul.f32.gmra.mxu0 %v555
    %v735 = vpop.f32.mrf.mxu0
    %v736 = vadd.f32 %v495, %v735
    %737 = vmatmul.f32.gmra.mxu0 %v557
    %v738 = vpop.f32.mrf.mxu0
    %v739 = vadd.f32 %v499, %v738
    %740 = vmatmul.f32.gmra.mxu0 %v559
    %v741 = vpop.f32.mrf.mxu0
    %v742 = vadd.f32 %v503, %v741
    %743 = vmatmul.f32.gmra.mxu0 %v561
    %v744 = vpop.f32.mrf.mxu0
    %v745 = vadd.f32 %v507, %v744
    %746 = vmatmul.f32.gmra.mxu0 %v563
    %v747 = vpop.f32.mrf.mxu0
    %v748 = vadd.f32 %v511, %v747
    %749 = vmatmul.f32.gmra.mxu0 %v565
    %v750 = vpop.f32.mrf.mxu0
    %v751 = vadd.f32 %v515, %v750
    %752 = vmatmul.f32.gmra.mxu0 %v567
    %v753 = vpop.f32.mrf.mxu0
    %v754 = vadd.f32 %v519, %v753
    %755 = vmatmul.f32.gmra.mxu0 %v569
    %v756 = vpop.f32.mrf.mxu0
    %v757 = vadd.f32 %v523, %v756
    %758 = vmatmul.f32.gmra.mxu0 %v571
    %v759 = vpop.f32.mrf.mxu0
    %v760 = vadd.f32 %v527, %v759
    %761 = vmatmul.f32.gmra.mxu0 %v573
    %v762 = vpop.f32.mrf.mxu0
    %v763 = vadd.f32 %v531, %v762
    %764 = vmatmul.f32.gmra.mxu0 %v575
    %v765 = vpop.f32.mrf.mxu0
    %v766 = vadd.f32 %v535, %v765
    %767 = vmatmul.f32.gmra.mxu0 %v577
    %v768 = vpop.f32.mrf.mxu0
    %v769 = vadd.f32 %v539, %v768
    %770 = vmatmul.f32.gmra.mxu0 %v579
    %v771 = vpop.f32.mrf.mxu0
    %v772 = vadd.f32 %v543, %v771
    %773 = vmatmul.f32.gmra.mxu0 %v581
    %v774 = vpop.f32.mrf.mxu0
    %v775 = vadd.f32 %v547, %v774
    %776 = vmatmul.f32.gmra.mxu0 %v583
    %v777 = vpop.f32.mrf.mxu0
    %v778 = vadd.f32 %v551, %v777
    %779 = vdwg.mxu0
    %780 = vmatpush.msra.mxu0 0.0
    %781 = vmatpush.msra.mxu0 0.0
    %782 = vmatpush.msra.mxu0 0.0
    %783 = vmatpush.msra.mxu0 0.0
    %784 = vmatpush.msra.mxu0 0.0
    %785 = vmatpush.msra.mxu0 0.0
    %786 = vmatpush.msra.mxu0 0.0
    %787 = vmatpush.msra.mxu0 0.0
    %788 = vmatpush.msra.mxu0 0.0
    %789 = vmatpush.msra.mxu0 0.0
    %790 = vmatpush.msra.mxu0 0.0
    %791 = vmatpush.msra.mxu0 0.0
    %792 = vmatpush.msra.mxu0 %v488
    %793 = vmatpush.msra.mxu0 %v484
    %794 = vmatpush.msra.mxu0 %v480
    %795 = vmatpush.msra.mxu0 %v476
    %796 = vmatmul.f32.gmra.mxu0 %v553
    %v797 = vpop.f32.mrf.mxu0
    %v798 = vadd.f32 %v492, %v797
    %799 = vmatmul.f32.gmra.mxu0 %v555
    %v800 = vpop.f32.mrf.mxu0
    %v801 = vadd.f32 %v496, %v800
    %802 = vmatmul.f32.gmra.mxu0 %v557
    %v803 = vpop.f32.mrf.mxu0
    %v804 = vadd.f32 %v500, %v803
    %805 = vmatmul.f32.gmra.mxu0 %v559
    %v806 = vpop.f32.mrf.mxu0
    %v807 = vadd.f32 %v504, %v806
    %808 = vmatmul.f32.gmra.mxu0 %v561
    %v809 = vpop.f32.mrf.mxu0
    %v810 = vadd.f32 %v508, %v809
    %811 = vmatmul.f32.gmra.mxu0 %v563
    %v812 = vpop.f32.mrf.mxu0
    %v813 = vadd.f32 %v512, %v812
    %814 = vmatmul.f32.gmra.mxu0 %v565
    %v815 = vpop.f32.mrf.mxu0
    %v816 = vadd.f32 %v516, %v815
    %817 = vmatmul.f32.gmra.mxu0 %v567
    %v818 = vpop.f32.mrf.mxu0
    %v819 = vadd.f32 %v520, %v818
    %820 = vmatmul.f32.gmra.mxu0 %v569
    %v821 = vpop.f32.mrf.mxu0
    %v822 = vadd.f32 %v524, %v821
    %823 = vmatmul.f32.gmra.mxu0 %v571
    %v824 = vpop.f32.mrf.mxu0
    %v825 = vadd.f32 %v528, %v824
    %826 = vmatmul.f32.gmra.mxu0 %v573
    %v827 = vpop.f32.mrf.mxu0
    %v828 = vadd.f32 %v532, %v827
    %829 = vmatmul.f32.gmra.mxu0 %v575
    %v830 = vpop.f32.mrf.mxu0
    %v831 = vadd.f32 %v536, %v830
    %832 = vmatmul.f32.gmra.mxu0 %v577
    %v833 = vpop.f32.mrf.mxu0
    %v834 = vadd.f32 %v540, %v833
    %835 = vmatmul.f32.gmra.mxu0 %v579
    %v836 = vpop.f32.mrf.mxu0
    %v837 = vadd.f32 %v544, %v836
    %838 = vmatmul.f32.gmra.mxu0 %v581
    %v839 = vpop.f32.mrf.mxu0
    %v840 = vadd.f32 %v548, %v839
    %841 = vmatmul.f32.gmra.mxu0 %v583
    %v842 = vpop.f32.mrf.mxu0
    %v843 = vadd.f32 %v552, %v842
    %844 = vdwg.mxu0
    %845 = vmax.xlane.f32.xlu0 %v603
    %v846 = vpop.xlane.xlu0 %845
    %847 = vmax.xlane.f32.xlu0 %v606
    %v848 = vpop.xlane.xlu0 %847
    %849 = vmax.xlane.f32.xlu0 %v609
    %v850 = vpop.xlane.xlu0 %849
    %851 = vmax.xlane.f32.xlu0 %v612
    %v852 = vpop.xlane.xlu0 %851
    %853 = vmax.xlane.f32.xlu0 %v615
    %v854 = vpop.xlane.xlu0 %853
    %855 = vmax.xlane.f32.xlu0 %v618
    %v856 = vpop.xlane.xlu0 %855
    %857 = vmax.xlane.f32.xlu0 %v621
    %v858 = vpop.xlane.xlu0 %857
    %859 = vmax.xlane.f32.xlu0 %v624
    %v860 = vpop.xlane.xlu0 %859
    %861 = vmax.xlane.f32.xlu0 %v627
    %v862 = vpop.xlane.xlu0 %861
    %863 = vmax.xlane.f32.xlu0 %v630
    %v864 = vpop.xlane.xlu0 %863
    %865 = vmax.xlane.f32.xlu0 %v633
    %v866 = vpop.xlane.xlu0 %865
    %867 = vmax.xlane.f32.xlu0 %v636
    %v868 = vpop.xlane.xlu0 %867
    %869 = vmax.xlane.f32.xlu0 %v639
    %v870 = vpop.xlane.xlu0 %869
    %871 = vmax.xlane.f32.xlu0 %v642
    %v872 = vpop.xlane.xlu0 %871
    %873 = vmax.xlane.f32.xlu0 %v645
    %v874 = vpop.xlane.xlu0 %873
    %875 = vmax.xlane.f32.xlu0 %v648
    %v876 = vpop.xlane.xlu0 %875
    %v877 = vsub.f32 %v603, %v846
    %v878 = vsub.f32 %v606, %v848
    %v879 = vsub.f32 %v609, %v850
    %v880 = vsub.f32 %v612, %v852
    %v881 = vsub.f32 %v615, %v854
    %v882 = vsub.f32 %v618, %v856
    %v883 = vsub.f32 %v621, %v858
    %v884 = vsub.f32 %v624, %v860
    %v885 = vsub.f32 %v627, %v862
    %v886 = vsub.f32 %v630, %v864
    %v887 = vsub.f32 %v633, %v866
    %v888 = vsub.f32 %v636, %v868
    %v889 = vsub.f32 %v639, %v870
    %v890 = vsub.f32 %v642, %v872
    %v891 = vsub.f32 %v645, %v874
    %v892 = vsub.f32 %v648, %v876
    %v893 = vmul.f32 %v877, 1.442695
    %v894 = vpow.pop %v893
    %v895 = vmul.f32 %v878, 1.442695
    %v896 = vpow.pop %v895
    %v897 = vmul.f32 %v879, 1.442695
    %v898 = vpow.pop %v897
    %v899 = vmul.f32 %v880, 1.442695
    %v900 = vpow.pop %v899
    %v901 = vmul.f32 %v881, 1.442695
    %v902 = vpow.pop %v901
    %v903 = vmul.f32 %v882, 1.442695
    %v904 = vpow.pop %v903
    %v905 = vmul.f32 %v883, 1.442695
    %v906 = vpow.pop %v905
    %v907 = vmul.f32 %v884, 1.442695
    %v908 = vpow.pop %v907
    %v909 = vmul.f32 %v885, 1.442695
    %v910 = vpow.pop %v909
    %v911 = vmul.f32 %v886, 1.442695
    %v912 = vpow.pop %v911
    %v913 = vmul.f32 %v887, 1.442695
    %v914 = vpow.pop %v913
    %v915 = vmul.f32 %v888, 1.442695
    %v916 = vpow.pop %v915
    %v917 = vmul.f32 %v889, 1.442695
    %v918 = vpow.pop %v917
    %v919 = vmul.f32 %v890, 1.442695
    %v920 = vpow.pop %v919
    %v921 = vmul.f32 %v891, 1.442695
    %v922 = vpow.pop %v921
    %v923 = vmul.f32 %v892, 1.442695
    %v924 = vpow.pop %v923
    %925 = vadd.xlane.f32.xlu0 %v894
    %v926 = vpop.xlane.xlu0 %925
    %927 = vadd.xlane.f32.xlu0 %v896
    %v928 = vpop.xlane.xlu0 %927
    %929 = vadd.xlane.f32.xlu0 %v898
    %v930 = vpop.xlane.xlu0 %929
    %931 = vadd.xlane.f32.xlu0 %v900
    %v932 = vpop.xlane.xlu0 %931
    %933 = vadd.xlane.f32.xlu0 %v902
    %v934 = vpop.xlane.xlu0 %933
    %935 = vadd.xlane.f32.xlu0 %v904
    %v936 = vpop.xlane.xlu0 %935
    %937 = vadd.xlane.f32.xlu0 %v906
    %v938 = vpop.xlane.xlu0 %937
    %939 = vadd.xlane.f32.xlu0 %v908
    %v940 = vpop.xlane.xlu0 %939
    %941 = vadd.xlane.f32.xlu0 %v910
    %v942 = vpop.xlane.xlu0 %941
    %943 = vadd.xlane.f32.xlu0 %v912
    %v944 = vpop.xlane.xlu0 %943
    %945 = vadd.xlane.f32.xlu0 %v914
    %v946 = vpop.xlane.xlu0 %945
    %947 = vadd.xlane.f32.xlu0 %v916
    %v948 = vpop.xlane.xlu0 %947
    %949 = vadd.xlane.f32.xlu0 %v918
    %v950 = vpop.xlane.xlu0 %949
    %951 = vadd.xlane.f32.xlu0 %v920
    %v952 = vpop.xlane.xlu0 %951
    %953 = vadd.xlane.f32.xlu0 %v922
    %v954 = vpop.xlane.xlu0 %953
    %955 = vadd.xlane.f32.xlu0 %v924
    %v956 = vpop.xlane.xlu0 %955
    %v957 = vrcp.pop %v926
    %v958 = vrcp.pop %v928
    %v959 = vrcp.pop %v930
    %v960 = vrcp.pop %v932
    %v961 = vrcp.pop %v934
    %v962 = vrcp.pop %v936
    %v963 = vrcp.pop %v938
    %v964 = vrcp.pop %v940
    %v965 = vrcp.pop %v942
    %v966 = vrcp.pop %v944
    %v967 = vrcp.pop %v946
    %v968 = vrcp.pop %v948
    %v969 = vrcp.pop %v950
    %v970 = vrcp.pop %v952
    %v971 = vrcp.pop %v954
    %v972 = vrcp.pop %v956
    %v973 = vmul.f32 %v894, %v957
    %v974 = vmul.f32 %v896, %v958
    %v975 = vmul.f32 %v898, %v959
    %v976 = vmul.f32 %v900, %v960
    %v977 = vmul.f32 %v902, %v961
    %v978 = vmul.f32 %v904, %v962
    %v979 = vmul.f32 %v906, %v963
    %v980 = vmul.f32 %v908, %v964
    %v981 = vmul.f32 %v910, %v965
    %v982 = vmul.f32 %v912, %v966
    %v983 = vmul.f32 %v914, %v967
    %v984 = vmul.f32 %v916, %v968
    %v985 = vmul.f32 %v918, %v969
    %v986 = vmul.f32 %v920, %v970
    %v987 = vmul.f32 %v922, %v971
    %v988 = vmul.f32 %v924, %v972
    %989 = vmax.xlane.f32.xlu0 %v668
    %v990 = vpop.xlane.xlu0 %989
    %991 = vmax.xlane.f32.xlu0 %v671
    %v992 = vpop.xlane.xlu0 %991
    %993 = vmax.xlane.f32.xlu0 %v674
    %v994 = vpop.xlane.xlu0 %993
    %995 = vmax.xlane.f32.xlu0 %v677
    %v996 = vpop.xlane.xlu0 %995
    %997 = vmax.xlane.f32.xlu0 %v680
    %v998 = vpop.xlane.xlu0 %997
    %999 = vmax.xlane.f32.xlu0 %v683
    %v1000 = vpop.xlane.xlu0 %999
    %1001 = vmax.xlane.f32.xlu0 %v686
    %v1002 = vpop.xlane.xlu0 %1001
    %1003 = vmax.xlane.f32.xlu0 %v689
    %v1004 = vpop.xlane.xlu0 %1003
    %1005 = vmax.xlane.f32.xlu0 %v692
    %v1006 = vpop.xlane.xlu0 %1005
    %1007 = vmax.xlane.f32.xlu0 %v695
    %v1008 = vpop.xlane.xlu0 %1007
    %1009 = vmax.xlane.f32.xlu0 %v698
    %v1010 = vpop.xlane.xlu0 %1009
    %1011 = vmax.xlane.f32.xlu0 %v701
    %v1012 = vpop.xlane.xlu0 %1011
    %1013 = vmax.xlane.f32.xlu0 %v704
    %v1014 = vpop.xlane.xlu0 %1013
    %1015 = vmax.xlane.f32.xlu0 %v707
    %v1016 = vpop.xlane.xlu0 %1015
    %1017 = vmax.xlane.f32.xlu0 %v710
    %v1018 = vpop.xlane.xlu0 %1017
    %1019 = vmax.xlane.f32.xlu0 %v713
    %v1020 = vpop.xlane.xlu0 %1019
    %v1021 = vsub.f32 %v668, %v990
    %v1022 = vsub.f32 %v671, %v992
    %v1023 = vsub.f32 %v674, %v994
    %v1024 = vsub.f32 %v677, %v996
    %v1025 = vsub.f32 %v680, %v998
    %v1026 = vsub.f32 %v683, %v1000
    %v1027 = vsub.f32 %v686, %v1002
    %v1028 = vsub.f32 %v689, %v1004
    %v1029 = vsub.f32 %v692, %v1006
    %v1030 = vsub.f32 %v695, %v1008
    %v1031 = vsub.f32 %v698, %v1010
    %v1032 = vsub.f32 %v701, %v1012
    %v1033 = vsub.f32 %v704, %v1014
    %v1034 = vsub.f32 %v707, %v1016
    %v1035 = vsub.f32 %v710, %v1018
    %v1036 = vsub.f32 %v713, %v1020
    %v1037 = vmul.f32 %v1021, 1.442695
    %v1038 = vpow.pop %v1037
    %v1039 = vmul.f32 %v1022, 1.442695
    %v1040 = vpow.pop %v1039
    %v1041 = vmul.f32 %v1023, 1.442695
    %v1042 = vpow.pop %v1041
    %v1043 = vmul.f32 %v1024, 1.442695
    %v1044 = vpow.pop %v1043
    %v1045 = vmul.f32 %v1025, 1.442695
    %v1046 = vpow.pop %v1045
    %v1047 = vmul.f32 %v1026, 1.442695
    %v1048 = vpow.pop %v1047
    %v1049 = vmul.f32 %v1027, 1.442695
    %v1050 = vpow.pop %v1049
    %v1051 = vmul.f32 %v1028, 1.442695
    %v1052 = vpow.pop %v1051
    %v1053 = vmul.f32 %v1029, 1.442695
    %v1054 = vpow.pop %v1053
    %v1055 = vmul.f32 %v1030, 1.442695
    %v1056 = vpow.pop %v1055
    %v1057 = vmul.f32 %v1031, 1.442695
    %v1058 = vpow.pop %v1057
    %v1059 = vmul.f32 %v1032, 1.442695
    %v1060 = vpow.pop %v1059
    %v1061 = vmul.f32 %v1033, 1.442695
    %v1062 = vpow.pop %v1061
    %v1063 = vmul.f32 %v1034, 1.442695
    %v1064 = vpow.pop %v1063
    %v1065 = vmul.f32 %v1035, 1.442695
    %v1066 = vpow.pop %v1065
    %v1067 = vmul.f32 %v1036, 1.442695
    %v1068 = vpow.pop %v1067
    %1069 = vadd.xlane.f32.xlu0 %v1038
    %v1070 = vpop.xlane.xlu0 %1069
    %1071 = vadd.xlane.f32.xlu0 %v1040
    %v1072 = vpop.xlane.xlu0 %1071
    %1073 = vadd.xlane.f32.xlu0 %v1042
    %v1074 = vpop.xlane.xlu0 %1073
    %1075 = vadd.xlane.f32.xlu0 %v1044
    %v1076 = vpop.xlane.xlu0 %1075
    %1077 = vadd.xlane.f32.xlu0 %v1046
    %v1078 = vpop.xlane.xlu0 %1077
    %1079 = vadd.xlane.f32.xlu0 %v1048
    %v1080 = vpop.xlane.xlu0 %1079
    %1081 = vadd.xlane.f32.xlu0 %v1050
    %v1082 = vpop.xlane.xlu0 %1081
    %1083 = vadd.xlane.f32.xlu0 %v1052
    %v1084 = vpop.xlane.xlu0 %1083
    %1085 = vadd.xlane.f32.xlu0 %v1054
    %v1086 = vpop.xlane.xlu0 %1085
    %1087 = vadd.xlane.f32.xlu0 %v1056
    %v1088 = vpop.xlane.xlu0 %1087
    %1089 = vadd.xlane.f32.xlu0 %v1058
    %v1090 = vpop.xlane.xlu0 %1089
    %1091 = vadd.xlane.f32.xlu0 %v1060
    %v1092 = vpop.xlane.xlu0 %1091
    %1093 = vadd.xlane.f32.xlu0 %v1062
    %v1094 = vpop.xlane.xlu0 %1093
    %1095 = vadd.xlane.f32.xlu0 %v1064
    %v1096 = vpop.xlane.xlu0 %1095
    %1097 = vadd.xlane.f32.xlu0 %v1066
    %v1098 = vpop.xlane.xlu0 %1097
    %1099 = vadd.xlane.f32.xlu0 %v1068
    %v1100 = vpop.xlane.xlu0 %1099
    %v1101 = vrcp.pop %v1070
    %v1102 = vrcp.pop %v1072
    %v1103 = vrcp.pop %v1074
    %v1104 = vrcp.pop %v1076
    %v1105 = vrcp.pop %v1078
    %v1106 = vrcp.pop %v1080
    %v1107 = vrcp.pop %v1082
    %v1108 = vrcp.pop %v1084
    %v1109 = vrcp.pop %v1086
    %v1110 = vrcp.pop %v1088
    %v1111 = vrcp.pop %v1090
    %v1112 = vrcp.pop %v1092
    %v1113 = vrcp.pop %v1094
    %v1114 = vrcp.pop %v1096
    %v1115 = vrcp.pop %v1098
    %v1116 = vrcp.pop %v1100
    %v1117 = vmul.f32 %v1038, %v1101
    %v1118 = vmul.f32 %v1040, %v1102
    %v1119 = vmul.f32 %v1042, %v1103
    %v1120 = vmul.f32 %v1044, %v1104
    %v1121 = vmul.f32 %v1046, %v1105
    %v1122 = vmul.f32 %v1048, %v1106
    %v1123 = vmul.f32 %v1050, %v1107
    %v1124 = vmul.f32 %v1052, %v1108
    %v1125 = vmul.f32 %v1054, %v1109
    %v1126 = vmul.f32 %v1056, %v1110
    %v1127 = vmul.f32 %v1058, %v1111
    %v1128 = vmul.f32 %v1060, %v1112
    %v1129 = vmul.f32 %v1062, %v1113
    %v1130 = vmul.f32 %v1064, %v1114
    %v1131 = vmul.f32 %v1066, %v1115
    %v1132 = vmul.f32 %v1068, %v1116
    %1133 = vmax.xlane.f32.xlu0 %v733
    %v1134 = vpop.xlane.xlu0 %1133
    %1135 = vmax.xlane.f32.xlu0 %v736
    %v1136 = vpop.xlane.xlu0 %1135
    %1137 = vmax.xlane.f32.xlu0 %v739
    %v1138 = vpop.xlane.xlu0 %1137
    %1139 = vmax.xlane.f32.xlu0 %v742
    %v1140 = vpop.xlane.xlu0 %1139
    %1141 = vmax.xlane.f32.xlu0 %v745
    %v1142 = vpop.xlane.xlu0 %1141
    %1143 = vmax.xlane.f32.xlu0 %v748
    %v1144 = vpop.xlane.xlu0 %1143
    %1145 = vmax.xlane.f32.xlu0 %v751
    %v1146 = vpop.xlane.xlu0 %1145
    %1147 = vmax.xlane.f32.xlu0 %v754
    %v1148 = vpop.xlane.xlu0 %1147
    %1149 = vmax.xlane.f32.xlu0 %v757
    %v1150 = vpop.xlane.xlu0 %1149
    %1151 = vmax.xlane.f32.xlu0 %v760
    %v1152 = vpop.xlane.xlu0 %1151
    %1153 = vmax.xlane.f32.xlu0 %v763
    %v1154 = vpop.xlane.xlu0 %1153
    %1155 = vmax.xlane.f32.xlu0 %v766
    %v1156 = vpop.xlane.xlu0 %1155
    %1157 = vmax.xlane.f32.xlu0 %v769
    %v1158 = vpop.xlane.xlu0 %1157
    %1159 = vmax.xlane.f32.xlu0 %v772
    %v1160 = vpop.xlane.xlu0 %1159
    %1161 = vmax.xlane.f32.xlu0 %v775
    %v1162 = vpop.xlane.xlu0 %1161
    %1163 = vmax.xlane.f32.xlu0 %v778
    %v1164 = vpop.xlane.xlu0 %1163
    %v1165 = vsub.f32 %v733, %v1134
    %v1166 = vsub.f32 %v736, %v1136
    %v1167 = vsub.f32 %v739, %v1138
    %v1168 = vsub.f32 %v742, %v1140
    %v1169 = vsub.f32 %v745, %v1142
    %v1170 = vsub.f32 %v748, %v1144
    %v1171 = vsub.f32 %v751, %v1146
    %v1172 = vsub.f32 %v754, %v1148
    %v1173 = vsub.f32 %v757, %v1150
    %v1174 = vsub.f32 %v760, %v1152
    %v1175 = vsub.f32 %v763, %v1154
    %v1176 = vsub.f32 %v766, %v1156
    %v1177 = vsub.f32 %v769, %v1158
    %v1178 = vsub.f32 %v772, %v1160
    %v1179 = vsub.f32 %v775, %v1162
    %v1180 = vsub.f32 %v778, %v1164
    %v1181 = vmul.f32 %v1165, 1.442695
    %v1182 = vpow.pop %v1181
    %v1183 = vmul.f32 %v1166, 1.442695
    %v1184 = vpow.pop %v1183
    %v1185 = vmul.f32 %v1167, 1.442695
    %v1186 = vpow.pop %v1185
    %v1187 = vmul.f32 %v1168, 1.442695
    %v1188 = vpow.pop %v1187
    %v1189 = vmul.f32 %v1169, 1.442695
    %v1190 = vpow.pop %v1189
    %v1191 = vmul.f32 %v1170, 1.442695
    %v1192 = vpow.pop %v1191
    %v1193 = vmul.f32 %v1171, 1.442695
    %v1194 = vpow.pop %v1193
    %v1195 = vmul.f32 %v1172, 1.442695
    %v1196 = vpow.pop %v1195
    %v1197 = vmul.f32 %v1173, 1.442695
    %v1198 = vpow.pop %v1197
    %v1199 = vmul.f32 %v1174, 1.442695
    %v1200 = vpow.pop %v1199
    %v1201 = vmul.f32 %v1175, 1.442695
    %v1202 = vpow.pop %v1201
    %v1203 = vmul.f32 %v1176, 1.442695
    %v1204 = vpow.pop %v1203
    %v1205 = vmul.f32 %v1177, 1.442695
    %v1206 = vpow.pop %v1205
    %v1207 = vmul.f32 %v1178, 1.442695
    %v1208 = vpow.pop %v1207
    %v1209 = vmul.f32 %v1179, 1.442695
    %v1210 = vpow.pop %v1209
    %v1211 = vmul.f32 %v1180, 1.442695
    %v1212 = vpow.pop %v1211
    %1213 = vadd.xlane.f32.xlu0 %v1182
    %v1214 = vpop.xlane.xlu0 %1213
    %1215 = vadd.xlane.f32.xlu0 %v1184
    %v1216 = vpop.xlane.xlu0 %1215
    %1217 = vadd.xlane.f32.xlu0 %v1186
    %v1218 = vpop.xlane.xlu0 %1217
    %1219 = vadd.xlane.f32.xlu0 %v1188
    %v1220 = vpop.xlane.xlu0 %1219
    %1221 = vadd.xlane.f32.xlu0 %v1190
    %v1222 = vpop.xlane.xlu0 %1221
    %1223 = vadd.xlane.f32.xlu0 %v1192
    %v1224 = vpop.xlane.xlu0 %1223
    %1225 = vadd.xlane.f32.xlu0 %v1194
    %v1226 = vpop.xlane.xlu0 %1225
    %1227 = vadd.xlane.f32.xlu0 %v1196
    %v1228 = vpop.xlane.xlu0 %1227
    %1229 = vadd.xlane.f32.xlu0 %v1198
    %v1230 = vpop.xlane.xlu0 %1229
    %1231 = vadd.xlane.f32.xlu0 %v1200
    %v1232 = vpop.xlane.xlu0 %1231
    %1233 = vadd.xlane.f32.xlu0 %v1202
    %v1234 = vpop.xlane.xlu0 %1233
    %1235 = vadd.xlane.f32.xlu0 %v1204
    %v1236 = vpop.xlane.xlu0 %1235
    %1237 = vadd.xlane.f32.xlu0 %v1206
    %v1238 = vpop.xlane.xlu0 %1237
    %1239 = vadd.xlane.f32.xlu0 %v1208
    %v1240 = vpop.xlane.xlu0 %1239
    %1241 = vadd.xlane.f32.xlu0 %v1210
    %v1242 = vpop.xlane.xlu0 %1241
    %1243 = vadd.xlane.f32.xlu0 %v1212
    %v1244 = vpop.xlane.xlu0 %1243
    %v1245 = vrcp.pop %v1214
    %v1246 = vrcp.pop %v1216
    %v1247 = vrcp.pop %v1218
    %v1248 = vrcp.pop %v1220
    %v1249 = vrcp.pop %v1222
    %v1250 = vrcp.pop %v1224
    %v1251 = vrcp.pop %v1226
    %v1252 = vrcp.pop %v1228
    %v1253 = vrcp.pop %v1230
    %v1254 = vrcp.pop %v1232
    %v1255 = vrcp.pop %v1234
    %v1256 = vrcp.pop %v1236
    %v1257 = vrcp.pop %v1238
    %v1258 = vrcp.pop %v1240
    %v1259 = vrcp.pop %v1242
    %v1260 = vrcp.pop %v1244
    %v1261 = vmul.f32 %v1182, %v1245
    %v1262 = vmul.f32 %v1184, %v1246
    %v1263 = vmul.f32 %v1186, %v1247
    %v1264 = vmul.f32 %v1188, %v1248
    %v1265 = vmul.f32 %v1190, %v1249
    %v1266 = vmul.f32 %v1192, %v1250
    %v1267 = vmul.f32 %v1194, %v1251
    %v1268 = vmul.f32 %v1196, %v1252
    %v1269 = vmul.f32 %v1198, %v1253
    %v1270 = vmul.f32 %v1200, %v1254
    %v1271 = vmul.f32 %v1202, %v1255
    %v1272 = vmul.f32 %v1204, %v1256
    %v1273 = vmul.f32 %v1206, %v1257
    %v1274 = vmul.f32 %v1208, %v1258
    %v1275 = vmul.f32 %v1210, %v1259
    %v1276 = vmul.f32 %v1212, %v1260
    %1277 = vmax.xlane.f32.xlu0 %v798
    %v1278 = vpop.xlane.xlu0 %1277
    %1279 = vmax.xlane.f32.xlu0 %v801
    %v1280 = vpop.xlane.xlu0 %1279
    %1281 = vmax.xlane.f32.xlu0 %v804
    %v1282 = vpop.xlane.xlu0 %1281
    %1283 = vmax.xlane.f32.xlu0 %v807
    %v1284 = vpop.xlane.xlu0 %1283
    %1285 = vmax.xlane.f32.xlu0 %v810
    %v1286 = vpop.xlane.xlu0 %1285
    %1287 = vmax.xlane.f32.xlu0 %v813
    %v1288 = vpop.xlane.xlu0 %1287
    %1289 = vmax.xlane.f32.xlu0 %v816
    %v1290 = vpop.xlane.xlu0 %1289
    %1291 = vmax.xlane.f32.xlu0 %v819
    %v1292 = vpop.xlane.xlu0 %1291
    %1293 = vmax.xlane.f32.xlu0 %v822
    %v1294 = vpop.xlane.xlu0 %1293
    %1295 = vmax.xlane.f32.xlu0 %v825
    %v1296 = vpop.xlane.xlu0 %1295
    %1297 = vmax.xlane.f32.xlu0 %v828
    %v1298 = vpop.xlane.xlu0 %1297
    %1299 = vmax.xlane.f32.xlu0 %v831
    %v1300 = vpop.xlane.xlu0 %1299
    %1301 = vmax.xlane.f32.xlu0 %v834
    %v1302 = vpop.xlane.xlu0 %1301
    %1303 = vmax.xlane.f32.xlu0 %v837
    %v1304 = vpop.xlane.xlu0 %1303
    %1305 = vmax.xlane.f32.xlu0 %v840
    %v1306 = vpop.xlane.xlu0 %1305
    %1307 = vmax.xlane.f32.xlu0 %v843
    %v1308 = vpop.xlane.xlu0 %1307
    %v1309 = vsub.f32 %v798, %v1278
    %v1310 = vsub.f32 %v801, %v1280
    %v1311 = vsub.f32 %v804, %v1282
    %v1312 = vsub.f32 %v807, %v1284
    %v1313 = vsub.f32 %v810, %v1286
    %v1314 = vsub.f32 %v813, %v1288
    %v1315 = vsub.f32 %v816, %v1290
    %v1316 = vsub.f32 %v819, %v1292
    %v1317 = vsub.f32 %v822, %v1294
    %v1318 = vsub.f32 %v825, %v1296
    %v1319 = vsub.f32 %v828, %v1298
    %v1320 = vsub.f32 %v831, %v1300
    %v1321 = vsub.f32 %v834, %v1302
    %v1322 = vsub.f32 %v837, %v1304
    %v1323 = vsub.f32 %v840, %v1306
    %v1324 = vsub.f32 %v843, %v1308
    %v1325 = vmul.f32 %v1309, 1.442695
    %v1326 = vpow.pop %v1325
    %v1327 = vmul.f32 %v1310, 1.442695
    %v1328 = vpow.pop %v1327
    %v1329 = vmul.f32 %v1311, 1.442695
    %v1330 = vpow.pop %v1329
    %v1331 = vmul.f32 %v1312, 1.442695
    %v1332 = vpow.pop %v1331
    %v1333 = vmul.f32 %v1313, 1.442695
    %v1334 = vpow.pop %v1333
    %v1335 = vmul.f32 %v1314, 1.442695
    %v1336 = vpow.pop %v1335
    %v1337 = vmul.f32 %v1315, 1.442695
    %v1338 = vpow.pop %v1337
    %v1339 = vmul.f32 %v1316, 1.442695
    %v1340 = vpow.pop %v1339
    %v1341 = vmul.f32 %v1317, 1.442695
    %v1342 = vpow.pop %v1341
    %v1343 = vmul.f32 %v1318, 1.442695
    %v1344 = vpow.pop %v1343
    %v1345 = vmul.f32 %v1319, 1.442695
    %v1346 = vpow.pop %v1345
    %v1347 = vmul.f32 %v1320, 1.442695
    %v1348 = vpow.pop %v1347
    %v1349 = vmul.f32 %v1321, 1.442695
    %v1350 = vpow.pop %v1349
    %v1351 = vmul.f32 %v1322, 1.442695
    %v1352 = vpow.pop %v1351
    %v1353 = vmul.f32 %v1323, 1.442695
    %v1354 = vpow.pop %v1353
    %v1355 = vmul.f32 %v1324, 1.442695
    %v1356 = vpow.pop %v1355
    %1357 = vadd.xlane.f32.xlu0 %v1326
    %v1358 = vpop.xlane.xlu0 %1357
    %1359 = vadd.xlane.f32.xlu0 %v1328
    %v1360 = vpop.xlane.xlu0 %1359
    %1361 = vadd.xlane.f32.xlu0 %v1330
    %v1362 = vpop.xlane.xlu0 %1361
    %1363 = vadd.xlane.f32.xlu0 %v1332
    %v1364 = vpop.xlane.xlu0 %1363
    %1365 = vadd.xlane.f32.xlu0 %v1334
    %v1366 = vpop.xlane.xlu0 %1365
    %1367 = vadd.xlane.f32.xlu0 %v1336
    %v1368 = vpop.xlane.xlu0 %1367
    %1369 = vadd.xlane.f32.xlu0 %v1338
    %v1370 = vpop.xlane.xlu0 %1369
    %1371 = vadd.xlane.f32.xlu0 %v1340
    %v1372 = vpop.xlane.xlu0 %1371
    %1373 = vadd.xlane.f32.xlu0 %v1342
    %v1374 = vpop.xlane.xlu0 %1373
    %1375 = vadd.xlane.f32.xlu0 %v1344
    %v1376 = vpop.xlane.xlu0 %1375
    %1377 = vadd.xlane.f32.xlu0 %v1346
    %v1378 = vpop.xlane.xlu0 %1377
    %1379 = vadd.xlane.f32.xlu0 %v1348
    %v1380 = vpop.xlane.xlu0 %1379
    %1381 = vadd.xlane.f32.xlu0 %v1350
    %v1382 = vpop.xlane.xlu0 %1381
    %1383 = vadd.xlane.f32.xlu0 %v1352
    %v1384 = vpop.xlane.xlu0 %1383
    %1385 = vadd.xlane.f32.xlu0 %v1354
    %v1386 = vpop.xlane.xlu0 %1385
    %1387 = vadd.xlane.f32.xlu0 %v1356
    %v1388 = vpop.xlane.xlu0 %1387
    %v1389 = vrcp.pop %v1358
    %v1390 = vrcp.pop %v1360
    %v1391 = vrcp.pop %v1362
    %v1392 = vrcp.pop %v1364
    %v1393 = vrcp.pop %v1366
    %v1394 = vrcp.pop %v1368
    %v1395 = vrcp.pop %v1370
    %v1396 = vrcp.pop %v1372
    %v1397 = vrcp.pop %v1374
    %v1398 = vrcp.pop %v1376
    %v1399 = vrcp.pop %v1378
    %v1400 = vrcp.pop %v1380
    %v1401 = vrcp.pop %v1382
    %v1402 = vrcp.pop %v1384
    %v1403 = vrcp.pop %v1386
    %v1404 = vrcp.pop %v1388
    %v1405 = vmul.f32 %v1326, %v1389
    %v1406 = vmul.f32 %v1328, %v1390
    %v1407 = vmul.f32 %v1330, %v1391
    %v1408 = vmul.f32 %v1332, %v1392
    %v1409 = vmul.f32 %v1334, %v1393
    %v1410 = vmul.f32 %v1336, %v1394
    %v1411 = vmul.f32 %v1338, %v1395
    %v1412 = vmul.f32 %v1340, %v1396
    %v1413 = vmul.f32 %v1342, %v1397
    %v1414 = vmul.f32 %v1344, %v1398
    %v1415 = vmul.f32 %v1346, %v1399
    %v1416 = vmul.f32 %v1348, %v1400
    %v1417 = vmul.f32 %v1350, %v1401
    %v1418 = vmul.f32 %v1352, %v1402
    %v1419 = vmul.f32 %v1354, %v1403
    %v1420 = vmul.f32 %v1356, %v1404
    %v1421 = vld [vmem:[#allocation3] sm:$0xff]
    %v1422 = vld [vmem:[#allocation3 + $0x8] sm:$0xff]
    %v1423 = vld [vmem:[#allocation3 + $0x10] sm:$0xff]
    %v1424 = vld [vmem:[#allocation3 + $0x18] sm:$0xff]
    %v1425 = vld [vmem:[#allocation3 + $0x20] sm:$0xff]
    %v1426 = vld [vmem:[#allocation3 + $0x28] sm:$0xff]
    %v1427 = vld [vmem:[#allocation3 + $0x30] sm:$0xff]
    %v1428 = vld [vmem:[#allocation3 + $0x38] sm:$0xff]
    %v1429 = vld [vmem:[#allocation3 + $0x40] sm:$0xff]
    %v1430 = vld [vmem:[#allocation3 + $0x48] sm:$0xff]
    %v1431 = vld [vmem:[#allocation3 + $0x50] sm:$0xff]
    %v1432 = vld [vmem:[#allocation3 + $0x58] sm:$0xff]
    %v1433 = vld [vmem:[#allocation3 + $0x60] sm:$0xff]
    %v1434 = vld [vmem:[#allocation3 + $0x68] sm:$0xff]
    %v1435 = vld [vmem:[#allocation3 + $0x70] sm:$0xff]
    %v1436 = vld [vmem:[#allocation3 + $0x78] sm:$0xff]
    %v1437 = vld [vmem:[#allocation3 + $0x80] sm:$0xff]
    %v1438 = vld [vmem:[#allocation3 + $0x88] sm:$0xff]
    %v1439 = vld [vmem:[#allocation3 + $0x90] sm:$0xff]
    %v1440 = vld [vmem:[#allocation3 + $0x98] sm:$0xff]
    %v1441 = vld [vmem:[#allocation3 + $0xa0] sm:$0xff]
    %v1442 = vld [vmem:[#allocation3 + $0xa8] sm:$0xff]
    %v1443 = vld [vmem:[#allocation3 + $0xb0] sm:$0xff]
    %v1444 = vld [vmem:[#allocation3 + $0xb8] sm:$0xff]
    %v1445 = vld [vmem:[#allocation3 + $0xc0] sm:$0xff]
    %v1446 = vld [vmem:[#allocation3 + $0xc8] sm:$0xff]
    %v1447 = vld [vmem:[#allocation3 + $0xd0] sm:$0xff]
    %v1448 = vld [vmem:[#allocation3 + $0xd8] sm:$0xff]
    %v1449 = vld [vmem:[#allocation3 + $0xe0] sm:$0xff]
    %v1450 = vld [vmem:[#allocation3 + $0xe8] sm:$0xff]
    %v1451 = vld [vmem:[#allocation3 + $0xf0] sm:$0xff]
    %v1452 = vld [vmem:[#allocation3 + $0xf8] sm:$0xff]
    %v1453 = vld [vmem:[#allocation3 + $0x100] sm:$0xff]
    %v1454 = vld [vmem:[#allocation3 + $0x108] sm:$0xff]
    %v1455 = vld [vmem:[#allocation3 + $0x110] sm:$0xff]
    %v1456 = vld [vmem:[#allocation3 + $0x118] sm:$0xff]
    %v1457 = vld [vmem:[#allocation3 + $0x120] sm:$0xff]
    %v1458 = vld [vmem:[#allocation3 + $0x128] sm:$0xff]
    %v1459 = vld [vmem:[#allocation3 + $0x130] sm:$0xff]
    %v1460 = vld [vmem:[#allocation3 + $0x138] sm:$0xff]
    %v1461 = vld [vmem:[#allocation3 + $0x140] sm:$0xff]
    %v1462 = vld [vmem:[#allocation3 + $0x148] sm:$0xff]
    %v1463 = vld [vmem:[#allocation3 + $0x150] sm:$0xff]
    %v1464 = vld [vmem:[#allocation3 + $0x158] sm:$0xff]
    %v1465 = vld [vmem:[#allocation3 + $0x160] sm:$0xff]
    %v1466 = vld [vmem:[#allocation3 + $0x168] sm:$0xff]
    %v1467 = vld [vmem:[#allocation3 + $0x170] sm:$0xff]
    %v1468 = vld [vmem:[#allocation3 + $0x178] sm:$0xff]
    %v1469 = vld [vmem:[#allocation3 + $0x180] sm:$0xff]
    %v1470 = vld [vmem:[#allocation3 + $0x188] sm:$0xff]
    %v1471 = vld [vmem:[#allocation3 + $0x190] sm:$0xff]
    %v1472 = vld [vmem:[#allocation3 + $0x198] sm:$0xff]
    %v1473 = vld [vmem:[#allocation3 + $0x1a0] sm:$0xff]
    %v1474 = vld [vmem:[#allocation3 + $0x1a8] sm:$0xff]
    %v1475 = vld [vmem:[#allocation3 + $0x1b0] sm:$0xff]
    %v1476 = vld [vmem:[#allocation3 + $0x1b8] sm:$0xff]
    %v1477 = vld [vmem:[#allocation3 + $0x1c0] sm:$0xff]
    %v1478 = vld [vmem:[#allocation3 + $0x1c8] sm:$0xff]
    %v1479 = vld [vmem:[#allocation3 + $0x1d0] sm:$0xff]
    %v1480 = vld [vmem:[#allocation3 + $0x1d8] sm:$0xff]
    %v1481 = vld [vmem:[#allocation3 + $0x1e0] sm:$0xff]
    %v1482 = vld [vmem:[#allocation3 + $0x1e8] sm:$0xff]
    %v1483 = vld [vmem:[#allocation3 + $0x1f0] sm:$0xff]
    %v1484 = vld [vmem:[#allocation3 + $0x1f8] sm:$0xff]
    %1485 = vmatpush.msra.mxu0 %v1436
    %1486 = vmatpush.msra.mxu0 %v1435
    %1487 = vmatpush.msra.mxu0 %v1434
    %1488 = vmatpush.msra.mxu0 %v1433
    %1489 = vmatpush.msra.mxu0 %v1432
    %1490 = vmatpush.msra.mxu0 %v1431
    %1491 = vmatpush.msra.mxu0 %v1430
    %1492 = vmatpush.msra.mxu0 %v1429
    %1493 = vmatpush.msra.mxu0 %v1428
    %1494 = vmatpush.msra.mxu0 %v1427
    %1495 = vmatpush.msra.mxu0 %v1426
    %1496 = vmatpush.msra.mxu0 %v1425
    %1497 = vmatpush.msra.mxu0 %v1424
    %1498 = vmatpush.msra.mxu0 %v1423
    %1499 = vmatpush.msra.mxu0 %v1422
    %1500 = vmatpush.msra.mxu0 %v1421
    %1501 = vmatmul.f32.gmra.mxu0 %v973
    %v1502 = vpop.f32.mrf.mxu0
    %v1503 = vadd.f32 0.0, %v1502
    %1504 = vmatmul.f32.gmra.mxu0 %v974
    %v1505 = vpop.f32.mrf.mxu0
    %v1506 = vadd.f32 0.0, %v1505
    %1507 = vmatmul.f32.gmra.mxu0 %v975
    %v1508 = vpop.f32.mrf.mxu0
    %v1509 = vadd.f32 0.0, %v1508
    %1510 = vmatmul.f32.gmra.mxu0 %v976
    %v1511 = vpop.f32.mrf.mxu0
    %v1512 = vadd.f32 0.0, %v1511
    %1513 = vmatmul.f32.gmra.mxu0 %v977
    %v1514 = vpop.f32.mrf.mxu0
    %v1515 = vadd.f32 0.0, %v1514
    %1516 = vmatmul.f32.gmra.mxu0 %v978
    %v1517 = vpop.f32.mrf.mxu0
    %v1518 = vadd.f32 0.0, %v1517
    %1519 = vmatmul.f32.gmra.mxu0 %v979
    %v1520 = vpop.f32.mrf.mxu0
    %v1521 = vadd.f32 0.0, %v1520
    %1522 = vmatmul.f32.gmra.mxu0 %v980
    %v1523 = vpop.f32.mrf.mxu0
    %v1524 = vadd.f32 0.0, %v1523
    %1525 = vmatmul.f32.gmra.mxu0 %v981
    %v1526 = vpop.f32.mrf.mxu0
    %v1527 = vadd.f32 0.0, %v1526
    %1528 = vmatmul.f32.gmra.mxu0 %v982
    %v1529 = vpop.f32.mrf.mxu0
    %v1530 = vadd.f32 0.0, %v1529
    %1531 = vmatmul.f32.gmra.mxu0 %v983
    %v1532 = vpop.f32.mrf.mxu0
    %v1533 = vadd.f32 0.0, %v1532
    %1534 = vmatmul.f32.gmra.mxu0 %v984
    %v1535 = vpop.f32.mrf.mxu0
    %v1536 = vadd.f32 0.0, %v1535
    %1537 = vmatmul.f32.gmra.mxu0 %v985
    %v1538 = vpop.f32.mrf.mxu0
    %v1539 = vadd.f32 0.0, %v1538
    %1540 = vmatmul.f32.gmra.mxu0 %v986
    %v1541 = vpop.f32.mrf.mxu0
    %v1542 = vadd.f32 0.0, %v1541
    %1543 = vmatmul.f32.gmra.mxu0 %v987
    %v1544 = vpop.f32.mrf.mxu0
    %v1545 = vadd.f32 0.0, %v1544
    %1546 = vmatmul.f32.gmra.mxu0 %v988
    %v1547 = vpop.f32.mrf.mxu0
    %v1548 = vadd.f32 0.0, %v1547
    %1549 = vdwg.mxu0
    %1550 = vmatpush.msra.mxu0 %v1452
    %1551 = vmatpush.msra.mxu0 %v1451
    %1552 = vmatpush.msra.mxu0 %v1450
    %1553 = vmatpush.msra.mxu0 %v1449
    %1554 = vmatpush.msra.mxu0 %v1448
    %1555 = vmatpush.msra.mxu0 %v1447
    %1556 = vmatpush.msra.mxu0 %v1446
    %1557 = vmatpush.msra.mxu0 %v1445
    %1558 = vmatpush.msra.mxu0 %v1444
    %1559 = vmatpush.msra.mxu0 %v1443
    %1560 = vmatpush.msra.mxu0 %v1442
    %1561 = vmatpush.msra.mxu0 %v1441
    %1562 = vmatpush.msra.mxu0 %v1440
    %1563 = vmatpush.msra.mxu0 %v1439
    %1564 = vmatpush.msra.mxu0 %v1438
    %1565 = vmatpush.msra.mxu0 %v1437
    %1566 = vmatmul.f32.gmra.mxu0 %v1117
    %v1567 = vpop.f32.mrf.mxu0
    %v1568 = vadd.f32 %v1503, %v1567
    %1569 = vmatmul.f32.gmra.mxu0 %v1118
    %v1570 = vpop.f32.mrf.mxu0
    %v1571 = vadd.f32 %v1506, %v1570
    %1572 = vmatmul.f32.gmra.mxu0 %v1119
    %v1573 = vpop.f32.mrf.mxu0
    %v1574 = vadd.f32 %v1509, %v1573
    %1575 = vmatmul.f32.gmra.mxu0 %v1120
    %v1576 = vpop.f32.mrf.mxu0
    %v1577 = vadd.f32 %v1512, %v1576
    %1578 = vmatmul.f32.gmra.mxu0 %v1121
    %v1579 = vpop.f32.mrf.mxu0
    %v1580 = vadd.f32 %v1515, %v1579
    %1581 = vmatmul.f32.gmra.mxu0 %v1122
    %v1582 = vpop.f32.mrf.mxu0
    %v1583 = vadd.f32 %v1518, %v1582
    %1584 = vmatmul.f32.gmra.mxu0 %v1123
    %v1585 = vpop.f32.mrf.mxu0
    %v1586 = vadd.f32 %v1521, %v1585
    %1587 = vmatmul.f32.gmra.mxu0 %v1124
    %v1588 = vpop.f32.mrf.mxu0
    %v1589 = vadd.f32 %v1524, %v1588
    %1590 = vmatmul.f32.gmra.mxu0 %v1125
    %v1591 = vpop.f32.mrf.mxu0
    %v1592 = vadd.f32 %v1527, %v1591
    %1593 = vmatmul.f32.gmra.mxu0 %v1126
    %v1594 = vpop.f32.mrf.mxu0
    %v1595 = vadd.f32 %v1530, %v1594
    %1596 = vmatmul.f32.gmra.mxu0 %v1127
    %v1597 = vpop.f32.mrf.mxu0
    %v1598 = vadd.f32 %v1533, %v1597
    %1599 = vmatmul.f32.gmra.mxu0 %v1128
    %v1600 = vpop.f32.mrf.mxu0
    %v1601 = vadd.f32 %v1536, %v1600
    %1602 = vmatmul.f32.gmra.mxu0 %v1129
    %v1603 = vpop.f32.mrf.mxu0
    %v1604 = vadd.f32 %v1539, %v1603
    %1605 = vmatmul.f32.gmra.mxu0 %v1130
    %v1606 = vpop.f32.mrf.mxu0
    %v1607 = vadd.f32 %v1542, %v1606
    %1608 = vmatmul.f32.gmra.mxu0 %v1131
    %v1609 = vpop.f32.mrf.mxu0
    %v1610 = vadd.f32 %v1545, %v1609
    %1611 = vmatmul.f32.gmra.mxu0 %v1132
    %v1612 = vpop.f32.mrf.mxu0
    %v1613 = vadd.f32 %v1548, %v1612
    %1614 = vdwg.mxu0
    %1615 = vmatpush.msra.mxu0 %v1468
    %1616 = vmatpush.msra.mxu0 %v1467
    %1617 = vmatpush.msra.mxu0 %v1466
    %1618 = vmatpush.msra.mxu0 %v1465
    %1619 = vmatpush.msra.mxu0 %v1464
    %1620 = vmatpush.msra.mxu0 %v1463
    %1621 = vmatpush.msra.mxu0 %v1462
    %1622 = vmatpush.msra.mxu0 %v1461
    %1623 = vmatpush.msra.mxu0 %v1460
    %1624 = vmatpush.msra.mxu0 %v1459
    %1625 = vmatpush.msra.mxu0 %v1458
    %1626 = vmatpush.msra.mxu0 %v1457
    %1627 = vmatpush.msra.mxu0 %v1456
    %1628 = vmatpush.msra.mxu0 %v1455
    %1629 = vmatpush.msra.mxu0 %v1454
    %1630 = vmatpush.msra.mxu0 %v1453
    %1631 = vmatmul.f32.gmra.mxu0 %v1261
    %v1632 = vpop.f32.mrf.mxu0
    %v1633 = vadd.f32 %v1568, %v1632
    %1634 = vmatmul.f32.gmra.mxu0 %v1262
    %v1635 = vpop.f32.mrf.mxu0
    %v1636 = vadd.f32 %v1571, %v1635
    %1637 = vmatmul.f32.gmra.mxu0 %v1263
    %v1638 = vpop.f32.mrf.mxu0
    %v1639 = vadd.f32 %v1574, %v1638
    %1640 = vmatmul.f32.gmra.mxu0 %v1264
    %v1641 = vpop.f32.mrf.mxu0
    %v1642 = vadd.f32 %v1577, %v1641
    %1643 = vmatmul.f32.gmra.mxu0 %v1265
    %v1644 = vpop.f32.mrf.mxu0
    %v1645 = vadd.f32 %v1580, %v1644
    %1646 = vmatmul.f32.gmra.mxu0 %v1266
    %v1647 = vpop.f32.mrf.mxu0
    %v1648 = vadd.f32 %v1583, %v1647
    %1649 = vmatmul.f32.gmra.mxu0 %v1267
    %v1650 = vpop.f32.mrf.mxu0
    %v1651 = vadd.f32 %v1586, %v1650
    %1652 = vmatmul.f32.gmra.mxu0 %v1268
    %v1653 = vpop.f32.mrf.mxu0
    %v1654 = vadd.f32 %v1589, %v1653
    %1655 = vmatmul.f32.gmra.mxu0 %v1269
    %v1656 = vpop.f32.mrf.mxu0
    %v1657 = vadd.f32 %v1592, %v1656
    %1658 = vmatmul.f32.gmra.mxu0 %v1270
    %v1659 = vpop.f32.mrf.mxu0
    %v1660 = vadd.f32 %v1595, %v1659
    %1661 = vmatmul.f32.gmra.mxu0 %v1271
    %v1662 = vpop.f32.mrf.mxu0
    %v1663 = vadd.f32 %v1598, %v1662
    %1664 = vmatmul.f32.gmra.mxu0 %v1272
    %v1665 = vpop.f32.mrf.mxu0
    %v1666 = vadd.f32 %v1601, %v1665
    %1667 = vmatmul.f32.gmra.mxu0 %v1273
    %v1668 = vpop.f32.mrf.mxu0
    %v1669 = vadd.f32 %v1604, %v1668
    %1670 = vmatmul.f32.gmra.mxu0 %v1274
    %v1671 = vpop.f32.mrf.mxu0
    %v1672 = vadd.f32 %v1607, %v1671
    %1673 = vmatmul.f32.gmra.mxu0 %v1275
    %v1674 = vpop.f32.mrf.mxu0
    %v1675 = vadd.f32 %v1610, %v1674
    %1676 = vmatmul.f32.gmra.mxu0 %v1276
    %v1677 = vpop.f32.mrf.mxu0
    %v1678 = vadd.f32 %v1613, %v1677
    %1679 = vdwg.mxu0
    %1680 = vmatpush.msra.mxu0 %v1484
    %1681 = vmatpush.msra.mxu0 %v1483
    %1682 = vmatpush.msra.mxu0 %v1482
    %1683 = vmatpush.msra.mxu0 %v1481
    %1684 = vmatpush.msra.mxu0 %v1480
    %1685 = vmatpush.msra.mxu0 %v1479
    %1686 = vmatpush.msra.mxu0 %v1478
    %1687 = vmatpush.msra.mxu0 %v1477
    %1688 = vmatpush.msra.mxu0 %v1476
    %1689 = vmatpush.msra.mxu0 %v1475
    %1690 = vmatpush.msra.mxu0 %v1474
    %1691 = vmatpush.msra.mxu0 %v1473
    %1692 = vmatpush.msra.mxu0 %v1472
    %1693 = vmatpush.msra.mxu0 %v1471
    %1694 = vmatpush.msra.mxu0 %v1470
    %1695 = vmatpush.msra.mxu0 %v1469
    %1696 = vmatmul.f32.gmra.mxu0 %v1405
    %v1697 = vpop.f32.mrf.mxu0
    %v1698 = vadd.f32 %v1633, %v1697
    %1699 = vmatmul.f32.gmra.mxu0 %v1406
    %v1700 = vpop.f32.mrf.mxu0
    %v1701 = vadd.f32 %v1636, %v1700
    %1702 = vmatmul.f32.gmra.mxu0 %v1407
    %v1703 = vpop.f32.mrf.mxu0
    %v1704 = vadd.f32 %v1639, %v1703
    %1705 = vmatmul.f32.gmra.mxu0 %v1408
    %v1706 = vpop.f32.mrf.mxu0
    %v1707 = vadd.f32 %v1642, %v1706
    %1708 = vmatmul.f32.gmra.mxu0 %v1409
    %v1709 = vpop.f32.mrf.mxu0
    %v1710 = vadd.f32 %v1645, %v1709
    %1711 = vmatmul.f32.gmra.mxu0 %v1410
    %v1712 = vpop.f32.mrf.mxu0
    %v1713 = vadd.f32 %v1648, %v1712
    %1714 = vmatmul.f32.gmra.mxu0 %v1411
    %v1715 = vpop.f32.mrf.mxu0
    %v1716 = vadd.f32 %v1651, %v1715
    %1717 = vmatmul.f32.gmra.mxu0 %v1412
    %v1718 = vpop.f32.mrf.mxu0
    %v1719 = vadd.f32 %v1654, %v1718
    %1720 = vmatmul.f32.gmra.mxu0 %v1413
    %v1721 = vpop.f32.mrf.mxu0
    %v1722 = vadd.f32 %v1657, %v1721
    %1723 = vmatmul.f32.gmra.mxu0 %v1414
    %v1724 = vpop.f32.mrf.mxu0
    %v1725 = vadd.f32 %v1660, %v1724
    %1726 = vmatmul.f32.gmra.mxu0 %v1415
    %v1727 = vpop.f32.mrf.mxu0
    %v1728 = vadd.f32 %v1663, %v1727
    %1729 = vmatmul.f32.gmra.mxu0 %v1416
    %v1730 = vpop.f32.mrf.mxu0
    %v1731 = vadd.f32 %v1666, %v1730
    %1732 = vmatmul.f32.gmra.mxu0 %v1417
    %v1733 = vpop.f32.mrf.mxu0
    %v1734 = vadd.f32 %v1669, %v1733
    %1735 = vmatmul.f32.gmra.mxu0 %v1418
    %v1736 = vpop.f32.mrf.mxu0
    %v1737 = vadd.f32 %v1672, %v1736
    %1738 = vmatmul.f32.gmra.mxu0 %v1419
    %v1739 = vpop.f32.mrf.mxu0
    %v1740 = vadd.f32 %v1675, %v1739
    %1741 = vmatmul.f32.gmra.mxu0 %v1420
    %v1742 = vpop.f32.mrf.mxu0
    %v1743 = vadd.f32 %v1678, %v1742
    %1744 = vdwg.mxu0
    %v1745 = vld [vmem:[%s4] sm:$0xff]
    %v1746 = vld [vmem:[%s4 + $0x8] sm:$0xff]
    %v1747 = vld [vmem:[%s4 + $0x10] sm:$0xff]
    %v1748 = vld [vmem:[%s4 + $0x18] sm:$0xff]
    %v1749 = vld [vmem:[%s5] sm:$0x1]
    %v1751 = vperm.slane %v1749, 0
    %v1754 = vsel %vm63, %v1698, 0
    %v1757 = vsel %vm63, %v1701, 0
    %v1760 = vsel %vm63, %v1704, 0
    %v1763 = vsel %vm63, %v1707, 0
    %v1766 = vsel %vm63, %v1710, 0
    %v1769 = vsel %vm63, %v1713, 0
    %v1772 = vsel %vm63, %v1716, 0
    %v1775 = vsel %vm63, %v1719, 0
    %v1778 = vsel %vm63, %v1722, 0
    %v1781 = vsel %vm63, %v1725, 0
    %v1784 = vsel %vm63, %v1728, 0
    %v1787 = vsel %vm63, %v1731, 0
    %v1790 = vsel %vm63, %v1734, 0
    %v1793 = vsel %vm63, %v1737, 0
    %v1796 = vsel %vm63, %v1740, 0
    %v1799 = vsel %vm63, %v1743, 0
    %1801 = vmatpush.msra.mxu0 0.0
    %1802 = vmatpush.msra.mxu0 0.0
    %1803 = vmatpush.msra.mxu0 0.0
    %1804 = vmatpush.msra.mxu0 0.0
    %1805 = vmatpush.msra.mxu0 0.0
    %1806 = vmatpush.msra.mxu0 0.0
    %1807 = vmatpush.msra.mxu0 0.0
    %1808 = vmatpush.msra.mxu0 0.0
    %1809 = vmatpush.msra.mxu0 0.0
    %1810 = vmatpush.msra.mxu0 0.0
    %1811 = vmatpush.msra.mxu0 0.0
    %1812 = vmatpush.msra.mxu0 0.0
    %1813 = vmatpush.msra.mxu0 %v1748
    %1814 = vmatpush.msra.mxu0 %v1747
    %1815 = vmatpush.msra.mxu0 %v1746
    %1816 = vmatpush.msra.mxu0 %v1745
    %1817 = vmatmul.f32.gmra.mxu0 %v1754
    %v1818 = vpop.f32.mrf.mxu0
    %v1819 = vadd.f32 %v1751, %v1818
    %1820 = vmatmul.f32.gmra.mxu0 %v1757
    %v1821 = vpop.f32.mrf.mxu0
    %v1822 = vadd.f32 %v1751, %v1821
    %1823 = vmatmul.f32.gmra.mxu0 %v1760
    %v1824 = vpop.f32.mrf.mxu0
    %v1825 = vadd.f32 %v1751, %v1824
    %1826 = vmatmul.f32.gmra.mxu0 %v1763
    %v1827 = vpop.f32.mrf.mxu0
    %v1828 = vadd.f32 %v1751, %v1827
    %1829 = vmatmul.f32.gmra.mxu0 %v1766
    %v1830 = vpop.f32.mrf.mxu0
    %v1831 = vadd.f32 %v1751, %v1830
    %1832 = vmatmul.f32.gmra.mxu0 %v1769
    %v1833 = vpop.f32.mrf.mxu0
    %v1834 = vadd.f32 %v1751, %v1833
    %1835 = vmatmul.f32.gmra.mxu0 %v1772
    %v1836 = vpop.f32.mrf.mxu0
    %v1837 = vadd.f32 %v1751, %v1836
    %1838 = vmatmul.f32.gmra.mxu0 %v1775
    %v1839 = vpop.f32.mrf.mxu0
    %v1840 = vadd.f32 %v1751, %v1839
    %1841 = vmatmul.f32.gmra.mxu0 %v1778
    %v1842 = vpop.f32.mrf.mxu0
    %v1843 = vadd.f32 %v1751, %v1842
    %1844 = vmatmul.f32.gmra.mxu0 %v1781
    %v1845 = vpop.f32.mrf.mxu0
    %v1846 = vadd.f32 %v1751, %v1845
    %1847 = vmatmul.f32.gmra.mxu0 %v1784
    %v1848 = vpop.f32.mrf.mxu0
    %v1849 = vadd.f32 %v1751, %v1848
    %1850 = vmatmul.f32.gmra.mxu0 %v1787
    %v1851 = vpop.f32.mrf.mxu0
    %v1852 = vadd.f32 %v1751, %v1851
    %1853 = vmatmul.f32.gmra.mxu0 %v1790
    %v1854 = vpop.f32.mrf.mxu0
    %v1855 = vadd.f32 %v1751, %v1854
    %1856 = vmatmul.f32.gmra.mxu0 %v1793
    %v1857 = vpop.f32.mrf.mxu0
    %v1858 = vadd.f32 %v1751, %v1857
    %1859 = vmatmul.f32.gmra.mxu0 %v1796
    %v1860 = vpop.f32.mrf.mxu0
    %v1861 = vadd.f32 %v1751, %v1860
    %1862 = vmatmul.f32.gmra.mxu0 %v1799
    %v1863 = vpop.f32.mrf.mxu0
    %v1864 = vadd.f32 %v1751, %v1863
    %1865 = vdwg.mxu0
    %1866 = vst.msk [vmem:[%s6] sm:$0xff] %vm63, %v1819
    %1867 = vst.msk [vmem:[%s6 + $0x8] sm:$0xff] %vm63, %v1822
    %1868 = vst.msk [vmem:[%s6 + $0x10] sm:$0xff] %vm63, %v1825
    %1869 = vst.msk [vmem:[%s6 + $0x18] sm:$0xff] %vm63, %v1828
    %1870 = vst.msk [vmem:[%s6 + $0x20] sm:$0xff] %vm63, %v1831
    %1871 = vst.msk [vmem:[%s6 + $0x28] sm:$0xff] %vm63, %v1834
    %1872 = vst.msk [vmem:[%s6 + $0x30] sm:$0xff] %vm63, %v1837
    %1873 = vst.msk [vmem:[%s6 + $0x38] sm:$0xff] %vm63, %v1840
    %1874 = vst.msk [vmem:[%s6 + $0x40] sm:$0xff] %vm63, %v1843
    %1875 = vst.msk [vmem:[%s6 + $0x48] sm:$0xff] %vm63, %v1846
    %1876 = vst.msk [vmem:[%s6 + $0x50] sm:$0xff] %vm63, %v1849
    %1877 = vst.msk [vmem:[%s6 + $0x58] sm:$0xff] %vm63, %v1852
    %1878 = vst.msk [vmem:[%s6 + $0x60] sm:$0xff] %vm63, %v1855
    %1879 = vst.msk [vmem:[%s6 + $0x68] sm:$0xff] %vm63, %v1858
    %1880 = vst.msk [vmem:[%s6 + $0x70] sm:$0xff] %vm63, %v1861
    %1881 = vst.msk [vmem:[%s6 + $0x78] sm:$0xff] %vm63, %v1864
    // Predicated region
    $region30: #{wmsa_forward.1} parent=1 // pred_check
      _
    $region31: #{wmsa_forward.1} parent=1 // pred_check_branch
      %1883 = sbr.rel (0) target = $region33
    $region32: #{wmsa_forward.1} parent=1 // pred_region
      _
    $region33: #{wmsa_forward.1} parent=1 // pred_fallthru
      _
    // Predicated region
    $region34: #{wmsa_forward.1} parent=1 // pred_check
      _
    $region35: #{wmsa_forward.1} parent=1 // pred_check_branch
      %1885 = sbr.rel (0) target = $region37
    $region36: #{wmsa_forward.1} parent=1 // pred_region
      _
    $region37: #{wmsa_forward.1} parent=1 // pred_fallthru
      _
    %1886 = vsyncpa [#allocation5], 1

</llo_original>
